<compile_context>
chip_gen: v7x
topology: tpu7x:2x2x1
jax: 0.10.0
libtpu: 0.0.40
codegen_flags: <defaults>
</compile_context>

<pallas_src>
import functools

import jax
import jax.numpy as jnp
from jax.experimental import pallas as pl
from jax.experimental.pallas import tpu as pltpu


# ----------------------------------------------------------------------------
# Fused multi-layer LSTM kernel.  grid=(1,): everything happens in one
# invocation; the time loop is an in-kernel (unrolled) fori_loop.
# ----------------------------------------------------------------------------
def fused_lstm_kernel(num_layers, x_ref, *args):
    """Ref layout (inputs, outputs, scratch):

      x_ref                      (T*B, IN)      flattened input sequence
      for each layer l:
        wih_l                    (in_f, 4H)     input->gates weights (pre-T)
        whh_l                    (H, 4H)        hidden->gates weights (pre-T)
        b_l                      (1, 4H)        b_ih + b_hh
      h0_ref, c0_ref             (L, B, H)      initial states
      --- outputs ---
      y_ref                      (T*B, H)       all last-layer hidden states
      hn_ref, cn_ref             (L, B, H)      final states per layer
      --- scratch ---
      xp_sc                      (T*B, 4H) f32  hoisted input projection
      hbuf_sc                    (T*B, H)  f32  current layer's hidden outputs
    """
    L = num_layers
    w_refs = args[:3 * L]
    h0_ref, c0_ref, y_ref, hn_ref, cn_ref, xp_sc, hbuf_sc = args[3 * L:]

    _, B, H = h0_ref.shape
    TB = y_ref.shape[0]
    T = TB // B

    # Lane mask for the tanh ("g") gate lanes [2H, 3H) of the (B, 4H) vreg.
    lane = jax.lax.broadcasted_iota(jnp.int32, (B, 4 * H), 1)
    g_mask = jnp.logical_and(lane >= 2 * H, lane < 3 * H)

    for l in range(L):  # static unroll over layers; all weights VMEM-resident
        wih = w_refs[3 * l][...].astype(jnp.float32)      # (in_f, 4H)
        whh = w_refs[3 * l + 1][...].astype(jnp.float32)  # (H, 4H)
        b = w_refs[3 * l + 2][...].astype(jnp.float32)    # (1, 4H)

        # Layer input: x for layer 0, previous layer's hidden states otherwise
        # (both stay in VMEM; no HBM round trip between layers).
        if l == 0:
            layer_in = x_ref[...].astype(jnp.float32)     # (T*B, IN)
        else:
            layer_in = hbuf_sc[...]                       # (T*B, H) f32

        # Hoisted input projection (+bias) for ALL timesteps: one big matmul.
        xp_sc[...] = jnp.dot(layer_in, wih,
                             preferred_element_type=jnp.float32) + b

        h0_l = h0_ref[l].astype(jnp.float32)              # (B, H)
        c0_l = c0_ref[l].astype(jnp.float32)

        def step(t, carry, whh=whh):
            h, c = carry
            off = pl.multiple_of(t * B, B)
            # Per-step work: only the recurrent matmul + elementwise gate math.
            gates = xp_sc[pl.ds(off, B), :] + jnp.dot(
                h, whh, preferred_element_type=jnp.float32)      # (B, 4H)
            # Full-vreg activation: sigmoid everywhere, tanh on the g lanes.
            act = jnp.where(g_mask, jnp.tanh(gates), jax.nn.sigmoid(gates))
            i_g = act[:, 0 * H:1 * H]
            f_g = act[:, 1 * H:2 * H]
            g_g = act[:, 2 * H:3 * H]
            o_g = act[:, 3 * H:4 * H]
            c_new = f_g * c + i_g * g_g
            h_new = o_g * jnp.tanh(c_new)
            hbuf_sc[pl.ds(off, B), :] = h_new
            return h_new, c_new

        h_n, c_n = jax.lax.fori_loop(0, T, step, (h0_l, c0_l), unroll=True)
        hn_ref[l] = h_n.astype(hn_ref.dtype)
        cn_ref[l] = c_n.astype(cn_ref.dtype)

    # Single lane-packed writeback of the whole output sequence.
    y_ref[...] = hbuf_sc[...].astype(y_ref.dtype)


# ----------------------------------------------------------------------------
# Wrapper: one pallas_call for the whole stacked LSTM.
# ----------------------------------------------------------------------------
def lstm_forward(x, layer_params, h0=None, c0=None):
    """Multi-layer LSTM forward (matches torch.nn.LSTM, batch_first=False).

    x: (T, B, input_size); layer_params: list of (w_ih_t, w_hh_t, b) where
    w_ih_t is (in_f, 4H), w_hh_t is (H, 4H), b is (1, 4H) (= b_ih + b_hh).
    h0/c0: (num_layers, B, H) or None (zeros, like h=None in PyTorch).
    Returns (y, (h_n, c_n)).
    """
    T, B, IN = x.shape
    L = len(layer_params)
    H = layer_params[0][1].shape[0]
    dt = x.dtype
    if h0 is None:
        h0 = jnp.zeros((L, B, H), dt)
    if c0 is None:
        c0 = jnp.zeros((L, B, H), dt)

    x2d = x.reshape(T * B, IN)

    flat_params = []
    in_specs = [pl.BlockSpec((T * B, IN), lambda i: (0, 0))]
    for (w_ih_t, w_hh_t, b) in layer_params:
        flat_params += [w_ih_t, w_hh_t, b]
        in_specs += [
            pl.BlockSpec(w_ih_t.shape, lambda i: (0, 0)),
            pl.BlockSpec(w_hh_t.shape, lambda i: (0, 0)),
            pl.BlockSpec(b.shape, lambda i: (0, 0)),
        ]
    in_specs += [
        pl.BlockSpec((L, B, H), lambda i: (0, 0, 0)),
        pl.BlockSpec((L, B, H), lambda i: (0, 0, 0)),
    ]

    y2d, h_n, c_n = pl.pallas_call(
        functools.partial(fused_lstm_kernel, L),
        out_shape=(
            jax.ShapeDtypeStruct((T * B, H), dt),   # y (all hidden states)
            jax.ShapeDtypeStruct((L, B, H), dt),    # h_n
            jax.ShapeDtypeStruct((L, B, H), dt),    # c_n
        ),
        grid_spec=pltpu.PrefetchScalarGridSpec(
            num_scalar_prefetch=0,
            grid=(1,),
            in_specs=in_specs,
            out_specs=[
                pl.BlockSpec((T * B, H), lambda i: (0, 0)),
                pl.BlockSpec((L, B, H), lambda i: (0, 0, 0)),
                pl.BlockSpec((L, B, H), lambda i: (0, 0, 0)),
            ],
            scratch_shapes=[
                pltpu.VMEM((T * B, 4 * H), jnp.float32),  # hoisted x projection
                pltpu.VMEM((T * B, H), jnp.float32),      # layer hidden outputs
            ],
        ),
        compiler_params=pltpu.CompilerParams(
            dimension_semantics=("arbitrary",)),
    )(x2d, *flat_params, h0, c0)

    return y2d.reshape(T, B, H), (h_n, c_n)


# ----------------------------------------------------------------------------
# Pure-JAX reference (same math, lax.scan) for correctness checking.
# ----------------------------------------------------------------------------
def lstm_ref(x, layer_params, h0, c0):
    inp = x
    h_list, c_list = [], []
    for l, (w_ih_t, w_hh_t, b) in enumerate(layer_params):
        H = w_hh_t.shape[0]

        def step(carry, x_t, w_ih_t=w_ih_t, w_hh_t=w_hh_t, b=b, H=H):
            h, c = carry
            gates = x_t @ w_ih_t + h @ w_hh_t + b[0]
            i = jax.nn.sigmoid(gates[:, 0 * H:1 * H])
            f = jax.nn.sigmoid(gates[:, 1 * H:2 * H])
            g = jnp.tanh(gates[:, 2 * H:3 * H])
            o = jax.nn.sigmoid(gates[:, 3 * H:4 * H])
            c = f * c + i * g
            h = o * jnp.tanh(c)
            return (h, c), h

        (h_n, c_n), ys = jax.lax.scan(step, (h0[l], c0[l]), inp)
        h_list.append(h_n)
        c_list.append(c_n)
        inp = ys
    return inp, (jnp.stack(h_list), jnp.stack(c_list))


# ----------------------------------------------------------------------------
if __name__ == "__main__":
    # seq=8, batch=8 (sublane-dense), input_size=32, hidden_size=32
    # (so 4H = 128 -> lane-dense gate vregs), num_layers=2.
    T, B, IN, H, L = 8, 8, 32, 32, 2

    key = jax.random.PRNGKey(0)
    keys = jax.random.split(key, 3 + 4 * L)
    x = jax.random.normal(keys[0], (T, B, IN), dtype=jnp.float32)

    # PyTorch-style init U(-1/sqrt(H), 1/sqrt(H)); weights transposed ONCE and
    # the two biases pre-summed at parameter-construction time.
    bound = 1.0 / jnp.sqrt(jnp.float32(H))
    layer_params = []
    for l in range(L):
        in_f = IN if l == 0 else H
        kw_ih, kw_hh, kb_ih, kb_hh = keys[1 + 4 * l: 1 + 4 * (l + 1)]
        w_ih = jax.random.uniform(kw_ih, (4 * H, in_f), jnp.float32, -bound, bound)
        w_hh = jax.random.uniform(kw_hh, (4 * H, H), jnp.float32, -bound, bound)
        b_ih = jax.random.uniform(kb_ih, (4 * H,), jnp.float32, -bound, bound)
        b_hh = jax.random.uniform(kb_hh, (4 * H,), jnp.float32, -bound, bound)
        layer_params.append((w_ih.T, w_hh.T, (b_ih + b_hh).reshape(1, 4 * H)))

    # --- h=None path (zero initial states), like the module's default ---
    y, (h_n, c_n) = lstm_forward(x, layer_params)
    jax.block_until_ready((y, h_n, c_n))

    h0z = jnp.zeros((L, B, H), jnp.float32)
    c0z = jnp.zeros((L, B, H), jnp.float32)
    y_ref, (h_ref, c_ref) = lstm_ref(x, layer_params, h0z, c0z)

    assert y.shape == (T, B, H)
    assert h_n.shape == (L, B, H) and c_n.shape == (L, B, H)
    assert jnp.allclose(y, y_ref, atol=1e-4, rtol=1e-4)
    assert jnp.allclose(h_n, h_ref, atol=1e-4, rtol=1e-4)
    assert jnp.allclose(c_n, c_ref, atol=1e-4, rtol=1e-4)

    # --- explicit (h0, c0) path ---
    h0 = jax.random.normal(keys[-2], (L, B, H), dtype=jnp.float32)
    c0 = jax.random.normal(keys[-1], (L, B, H), dtype=jnp.float32)
    y2, (h_n2, c_n2) = lstm_forward(x, layer_params, h0, c0)
    jax.block_until_ready((y2, h_n2, c_n2))
    y2_ref, (h2_ref, c2_ref) = lstm_ref(x, layer_params, h0, c0)
    assert jnp.allclose(y2, y2_ref, atol=1e-4, rtol=1e-4)
    assert jnp.allclose(h_n2, h2_ref, atol=1e-4, rtol=1e-4)
    assert jnp.allclose(c_n2, c2_ref, atol=1e-4, rtol=1e-4)

    print("KERNEL_OK")
</pallas_src>

<mosaic_0001>
module attributes {stable_mosaic.version = 11 : i64} {
  func.func @fused_lstm_kernel(%arg0: i32, %arg1: memref<64x32xf32, #tpu.memory_space<vmem>>, %arg2: memref<32x128xf32, #tpu.memory_space<vmem>>, %arg3: memref<32x128xf32, #tpu.memory_space<vmem>>, %arg4: memref<1x128xf32, #tpu.memory_space<vmem>>, %arg5: memref<32x128xf32, #tpu.memory_space<vmem>>, %arg6: memref<32x128xf32, #tpu.memory_space<vmem>>, %arg7: memref<1x128xf32, #tpu.memory_space<vmem>>, %arg8: memref<2x8x32xf32, #tpu.memory_space<vmem>>, %arg9: memref<2x8x32xf32, #tpu.memory_space<vmem>>, %arg10: memref<64x32xf32, #tpu.memory_space<vmem>>, %arg11: memref<2x8x32xf32, #tpu.memory_space<vmem>>, %arg12: memref<2x8x32xf32, #tpu.memory_space<vmem>>, %arg13: memref<64x128xf32, #tpu.memory_space<vmem>>, %arg14: memref<64x32xf32, #tpu.memory_space<vmem>>) attributes {dimension_semantics = [#tpu.dimension_semantics<arbitrary>], iteration_bounds = array<i64: 1>, scalar_prefetch = 0 : i64, scratch_operands = 2 : i64, tpu.core_type = #tpu.core_type<tc>, window_params = [{pipeline_mode = #tpu.pipeline_mode<synchronous>, transform_indices = @transform_0, window_bounds = array<i64: 64, 32>}, {pipeline_mode = #tpu.pipeline_mode<synchronous>, transform_indices = @transform_1, window_bounds = array<i64: 32, 128>}, {pipeline_mode = #tpu.pipeline_mode<synchronous>, transform_indices = @transform_2, window_bounds = array<i64: 32, 128>}, {pipeline_mode = #tpu.pipeline_mode<synchronous>, transform_indices = @transform_3, window_bounds = array<i64: 1, 128>}, {pipeline_mode = #tpu.pipeline_mode<synchronous>, transform_indices = @transform_4, window_bounds = array<i64: 32, 128>}, {pipeline_mode = #tpu.pipeline_mode<synchronous>, transform_indices = @transform_5, window_bounds = array<i64: 32, 128>}, {pipeline_mode = #tpu.pipeline_mode<synchronous>, transform_indices = @transform_6, window_bounds = array<i64: 1, 128>}, {pipeline_mode = #tpu.pipeline_mode<synchronous>, transform_indices = @transform_7, window_bounds = array<i64: 2, 8, 32>}, {pipeline_mode = #tpu.pipeline_mode<synchronous>, transform_indices = @transform_8, window_bounds = array<i64: 2, 8, 32>}, {pipeline_mode = #tpu.pipeline_mode<synchronous>, transform_indices = @transform_9, window_bounds = array<i64: 64, 32>}, {pipeline_mode = #tpu.pipeline_mode<synchronous>, transform_indices = @transform_10, window_bounds = array<i64: 2, 8, 32>}, {pipeline_mode = #tpu.pipeline_mode<synchronous>, transform_indices = @transform_11, window_bounds = array<i64: 2, 8, 32>}]} {
    %0 = tpu.iota {dimensions = array<i32: 1>} : vector<8x128xi32>
    %c64_i32 = arith.constant 64 : i32
    %1 = vector.broadcast %c64_i32 : i32 to vector<8x128xi32>
    %2 = arith.cmpi sge, %0, %1 : vector<8x128xi32>
    %c96_i32 = arith.constant 96 : i32
    %3 = vector.broadcast %c96_i32 : i32 to vector<8x128xi32>
    %4 = arith.cmpi slt, %0, %3 : vector<8x128xi32>
    %5 = arith.andi %2, %4 : vector<8x128xi1>
    %c0 = arith.constant 0 : index
    %c0_0 = arith.constant 0 : index
    %6 = vector.load %arg2[%c0, %c0_0] : memref<32x128xf32, #tpu.memory_space<vmem>>, vector<32x128xf32>
    %c0_1 = arith.constant 0 : index
    %c0_2 = arith.constant 0 : index
    %7 = vector.load %arg3[%c0_1, %c0_2] : memref<32x128xf32, #tpu.memory_space<vmem>>, vector<32x128xf32>
    %c0_3 = arith.constant 0 : index
    %c0_4 = arith.constant 0 : index
    %8 = vector.load %arg4[%c0_3, %c0_4] : memref<1x128xf32, #tpu.memory_space<vmem>>, vector<1x128xf32>
    %c0_5 = arith.constant 0 : index
    %c0_6 = arith.constant 0 : index
    %9 = vector.load %arg1[%c0_5, %c0_6] : memref<64x32xf32, #tpu.memory_space<vmem>>, vector<64x32xf32>
    %cst = arith.constant dense<0.000000e+00> : vector<64x128xf32>
    %10 = tpu.matmul %9, %6, %cst {dimension_numbers = #tpu.dot_dimension_numbers<[1], [0], [0], [1], [0, 0, 1, 1], [], []>} : vector<64x32xf32>, vector<32x128xf32>, vector<64x128xf32> -> vector<64x128xf32>
    %11 = vector.broadcast %8 : vector<1x128xf32> to vector<64x128xf32>
    %12 = arith.addf %10, %11 : vector<64x128xf32>
    %c0_7 = arith.constant 0 : index
    %c0_8 = arith.constant 0 : index
    %13 = vector.load %arg13[%c0_7, %c0_8] : memref<64x128xf32, #tpu.memory_space<vmem>>, vector<64x128xf32>
    tpu.vector_store %arg13[%c0_7, %c0_8], %12 {strides = array<i32>} : memref<64x128xf32, #tpu.memory_space<vmem>>, vector<64x128xf32>,
    %c0_9 = arith.constant 0 : index
    %c0_10 = arith.constant 0 : index
    %c0_11 = arith.constant 0 : index
    %14 = vector.load %arg8[%c0_9, %c0_10, %c0_11] : memref<2x8x32xf32, #tpu.memory_space<vmem>>, vector<1x8x32xf32>
    %15 = vector.shape_cast %14 : vector<1x8x32xf32> to vector<8x32xf32>
    %c0_12 = arith.constant 0 : index
    %c0_13 = arith.constant 0 : index
    %c0_14 = arith.constant 0 : index
    %16 = vector.load %arg9[%c0_12, %c0_13, %c0_14] : memref<2x8x32xf32, #tpu.memory_space<vmem>>, vector<1x8x32xf32>
    %17 = vector.shape_cast %16 : vector<1x8x32xf32> to vector<8x32xf32>
    %c0_i32 = arith.constant 0 : i32
    %c8_i32 = arith.constant 8 : i32
    %18 = arith.muli %c0_i32, %c8_i32 : i32
    %19 = tpu.assume_multiple %18, 8 : i32
    %20 = arith.index_cast %19 : i32 to index
    %c0_15 = arith.constant 0 : index
    %21 = vector.load %arg13[%20, %c0_15] : memref<64x128xf32, #tpu.memory_space<vmem>>, vector<8x128xf32>
    %cst_16 = arith.constant dense<0.000000e+00> : vector<8x128xf32>
    %22 = tpu.matmul %15, %7, %cst_16 {dimension_numbers = #tpu.dot_dimension_numbers<[1], [0], [0], [1], [0, 0, 1, 1], [], []>} : vector<8x32xf32>, vector<32x128xf32>, vector<8x128xf32> -> vector<8x128xf32>
    %23 = arith.addf %21, %22 : vector<8x128xf32>
    %24 = math.tanh %23 : vector<8x128xf32>
    %25 = arith.negf %23 : vector<8x128xf32>
    %26 = math.exp %25 : vector<8x128xf32>
    %cst_17 = arith.constant 1.000000e+00 : f32
    %27 = vector.broadcast %cst_17 : f32 to vector<8x128xf32>
    %28 = arith.addf %27, %26 : vector<8x128xf32>
    %29 = arith.divf %27, %28 : vector<8x128xf32>
    %30 = arith.select %5, %24, %29 : vector<8x128xi1>, vector<8x128xf32>
    %31 = vector.extract_strided_slice %30 {offsets = [0, 0], sizes = [8, 32], strides = [1, 1]} : vector<8x128xf32> to vector<8x32xf32>
    %32 = vector.extract_strided_slice %30 {offsets = [0, 32], sizes = [8, 32], strides = [1, 1]} : vector<8x128xf32> to vector<8x32xf32>
    %33 = vector.extract_strided_slice %30 {offsets = [0, 64], sizes = [8, 32], strides = [1, 1]} : vector<8x128xf32> to vector<8x32xf32>
    %34 = vector.extract_strided_slice %30 {offsets = [0, 96], sizes = [8, 32], strides = [1, 1]} : vector<8x128xf32> to vector<8x32xf32>
    %35 = arith.mulf %32, %17 : vector<8x32xf32>
    %36 = arith.mulf %31, %33 : vector<8x32xf32>
    %37 = arith.addf %35, %36 : vector<8x32xf32>
    %38 = math.tanh %37 : vector<8x32xf32>
    %39 = arith.mulf %34, %38 : vector<8x32xf32>
    %40 = arith.index_cast %19 : i32 to index
    %c0_18 = arith.constant 0 : index
    %41 = vector.load %arg14[%40, %c0_18] : memref<64x32xf32, #tpu.memory_space<vmem>>, vector<8x32xf32>
    tpu.vector_store %arg14[%40, %c0_18], %39 {strides = array<i32>} : memref<64x32xf32, #tpu.memory_space<vmem>>, vector<8x32xf32>,
    %c1_i32 = arith.constant 1 : i32
    %c8_i32_19 = arith.constant 8 : i32
    %42 = arith.muli %c1_i32, %c8_i32_19 : i32
    %43 = tpu.assume_multiple %42, 8 : i32
    %44 = arith.index_cast %43 : i32 to index
    %c0_20 = arith.constant 0 : index
    %45 = vector.load %arg13[%44, %c0_20] : memref<64x128xf32, #tpu.memory_space<vmem>>, vector<8x128xf32>
    %cst_21 = arith.constant dense<0.000000e+00> : vector<8x128xf32>
    %46 = tpu.matmul %39, %7, %cst_21 {dimension_numbers = #tpu.dot_dimension_numbers<[1], [0], [0], [1], [0, 0, 1, 1], [], []>} : vector<8x32xf32>, vector<32x128xf32>, vector<8x128xf32> -> vector<8x128xf32>
    %47 = arith.addf %45, %46 : vector<8x128xf32>
    %48 = math.tanh %47 : vector<8x128xf32>
    %49 = arith.negf %47 : vector<8x128xf32>
    %50 = math.exp %49 : vector<8x128xf32>
    %cst_22 = arith.constant 1.000000e+00 : f32
    %51 = vector.broadcast %cst_22 : f32 to vector<8x128xf32>
    %52 = arith.addf %51, %50 : vector<8x128xf32>
    %53 = arith.divf %51, %52 : vector<8x128xf32>
    %54 = arith.select %5, %48, %53 : vector<8x128xi1>, vector<8x128xf32>
    %55 = vector.extract_strided_slice %54 {offsets = [0, 0], sizes = [8, 32], strides = [1, 1]} : vector<8x128xf32> to vector<8x32xf32>
    %56 = vector.extract_strided_slice %54 {offsets = [0, 32], sizes = [8, 32], strides = [1, 1]} : vector<8x128xf32> to vector<8x32xf32>
    %57 = vector.extract_strided_slice %54 {offsets = [0, 64], sizes = [8, 32], strides = [1, 1]} : vector<8x128xf32> to vector<8x32xf32>
    %58 = vector.extract_strided_slice %54 {offsets = [0, 96], sizes = [8, 32], strides = [1, 1]} : vector<8x128xf32> to vector<8x32xf32>
    %59 = arith.mulf %56, %37 : vector<8x32xf32>
    %60 = arith.mulf %55, %57 : vector<8x32xf32>
    %61 = arith.addf %59, %60 : vector<8x32xf32>
    %62 = math.tanh %61 : vector<8x32xf32>
    %63 = arith.mulf %58, %62 : vector<8x32xf32>
    %64 = arith.index_cast %43 : i32 to index
    %c0_23 = arith.constant 0 : index
    %65 = vector.load %arg14[%64, %c0_23] : memref<64x32xf32, #tpu.memory_space<vmem>>, vector<8x32xf32>
    tpu.vector_store %arg14[%64, %c0_23], %63 {strides = array<i32>} : memref<64x32xf32, #tpu.memory_space<vmem>>, vector<8x32xf32>,
    %c2_i32 = arith.constant 2 : i32
    %c8_i32_24 = arith.constant 8 : i32
    %66 = arith.muli %c2_i32, %c8_i32_24 : i32
    %67 = tpu.assume_multiple %66, 8 : i32
    %68 = arith.index_cast %67 : i32 to index
    %c0_25 = arith.constant 0 : index
    %69 = vector.load %arg13[%68, %c0_25] : memref<64x128xf32, #tpu.memory_space<vmem>>, vector<8x128xf32>
    %cst_26 = arith.constant dense<0.000000e+00> : vector<8x128xf32>
    %70 = tpu.matmul %63, %7, %cst_26 {dimension_numbers = #tpu.dot_dimension_numbers<[1], [0], [0], [1], [0, 0, 1, 1], [], []>} : vector<8x32xf32>, vector<32x128xf32>, vector<8x128xf32> -> vector<8x128xf32>
    %71 = arith.addf %69, %70 : vector<8x128xf32>
    %72 = math.tanh %71 : vector<8x128xf32>
    %73 = arith.negf %71 : vector<8x128xf32>
    %74 = math.exp %73 : vector<8x128xf32>
    %cst_27 = arith.constant 1.000000e+00 : f32
    %75 = vector.broadcast %cst_27 : f32 to vector<8x128xf32>
    %76 = arith.addf %75, %74 : vector<8x128xf32>
    %77 = arith.divf %75, %76 : vector<8x128xf32>
    %78 = arith.select %5, %72, %77 : vector<8x128xi1>, vector<8x128xf32>
    %79 = vector.extract_strided_slice %78 {offsets = [0, 0], sizes = [8, 32], strides = [1, 1]} : vector<8x128xf32> to vector<8x32xf32>
    %80 = vector.extract_strided_slice %78 {offsets = [0, 32], sizes = [8, 32], strides = [1, 1]} : vector<8x128xf32> to vector<8x32xf32>
    %81 = vector.extract_strided_slice %78 {offsets = [0, 64], sizes = [8, 32], strides = [1, 1]} : vector<8x128xf32> to vector<8x32xf32>
    %82 = vector.extract_strided_slice %78 {offsets = [0, 96], sizes = [8, 32], strides = [1, 1]} : vector<8x128xf32> to vector<8x32xf32>
    %83 = arith.mulf %80, %61 : vector<8x32xf32>
    %84 = arith.mulf %79, %81 : vector<8x32xf32>
    %85 = arith.addf %83, %84 : vector<8x32xf32>
    %86 = math.tanh %85 : vector<8x32xf32>
    %87 = arith.mulf %82, %86 : vector<8x32xf32>
    %88 = arith.index_cast %67 : i32 to index
    %c0_28 = arith.constant 0 : index
    %89 = vector.load %arg14[%88, %c0_28] : memref<64x32xf32, #tpu.memory_space<vmem>>, vector<8x32xf32>
    tpu.vector_store %arg14[%88, %c0_28], %87 {strides = array<i32>} : memref<64x32xf32, #tpu.memory_space<vmem>>, vector<8x32xf32>,
    %c3_i32 = arith.constant 3 : i32
    %c8_i32_29 = arith.constant 8 : i32
    %90 = arith.muli %c3_i32, %c8_i32_29 : i32
    %91 = tpu.assume_multiple %90, 8 : i32
    %92 = arith.index_cast %91 : i32 to index
    %c0_30 = arith.constant 0 : index
    %93 = vector.load %arg13[%92, %c0_30] : memref<64x128xf32, #tpu.memory_space<vmem>>, vector<8x128xf32>
    %cst_31 = arith.constant dense<0.000000e+00> : vector<8x128xf32>
    %94 = tpu.matmul %87, %7, %cst_31 {dimension_numbers = #tpu.dot_dimension_numbers<[1], [0], [0], [1], [0, 0, 1, 1], [], []>} : vector<8x32xf32>, vector<32x128xf32>, vector<8x128xf32> -> vector<8x128xf32>
    %95 = arith.addf %93, %94 : vector<8x128xf32>
    %96 = math.tanh %95 : vector<8x128xf32>
    %97 = arith.negf %95 : vector<8x128xf32>
    %98 = math.exp %97 : vector<8x128xf32>
    %cst_32 = arith.constant 1.000000e+00 : f32
    %99 = vector.broadcast %cst_32 : f32 to vector<8x128xf32>
    %100 = arith.addf %99, %98 : vector<8x128xf32>
    %101 = arith.divf %99, %100 : vector<8x128xf32>
    %102 = arith.select %5, %96, %101 : vector<8x128xi1>, vector<8x128xf32>
    %103 = vector.extract_strided_slice %102 {offsets = [0, 0], sizes = [8, 32], strides = [1, 1]} : vector<8x128xf32> to vector<8x32xf32>
    %104 = vector.extract_strided_slice %102 {offsets = [0, 32], sizes = [8, 32], strides = [1, 1]} : vector<8x128xf32> to vector<8x32xf32>
    %105 = vector.extract_strided_slice %102 {offsets = [0, 64], sizes = [8, 32], strides = [1, 1]} : vector<8x128xf32> to vector<8x32xf32>
    %106 = vector.extract_strided_slice %102 {offsets = [0, 96], sizes = [8, 32], strides = [1, 1]} : vector<8x128xf32> to vector<8x32xf32>
    %107 = arith.mulf %104, %85 : vector<8x32xf32>
    %108 = arith.mulf %103, %105 : vector<8x32xf32>
    %109 = arith.addf %107, %108 : vector<8x32xf32>
    %110 = math.tanh %109 : vector<8x32xf32>
    %111 = arith.mulf %106, %110 : vector<8x32xf32>
    %112 = arith.index_cast %91 : i32 to index
    %c0_33 = arith.constant 0 : index
    %113 = vector.load %arg14[%112, %c0_33] : memref<64x32xf32, #tpu.memory_space<vmem>>, vector<8x32xf32>
    tpu.vector_store %arg14[%112, %c0_33], %111 {strides = array<i32>} : memref<64x32xf32, #tpu.memory_space<vmem>>, vector<8x32xf32>,
    %c4_i32 = arith.constant 4 : i32
    %c8_i32_34 = arith.constant 8 : i32
    %114 = arith.muli %c4_i32, %c8_i32_34 : i32
    %115 = tpu.assume_multiple %114, 8 : i32
    %116 = arith.index_cast %115 : i32 to index
    %c0_35 = arith.constant 0 : index
    %117 = vector.load %arg13[%116, %c0_35] : memref<64x128xf32, #tpu.memory_space<vmem>>, vector<8x128xf32>
    %cst_36 = arith.constant dense<0.000000e+00> : vector<8x128xf32>
    %118 = tpu.matmul %111, %7, %cst_36 {dimension_numbers = #tpu.dot_dimension_numbers<[1], [0], [0], [1], [0, 0, 1, 1], [], []>} : vector<8x32xf32>, vector<32x128xf32>, vector<8x128xf32> -> vector<8x128xf32>
    %119 = arith.addf %117, %118 : vector<8x128xf32>
    %120 = math.tanh %119 : vector<8x128xf32>
    %121 = arith.negf %119 : vector<8x128xf32>
    %122 = math.exp %121 : vector<8x128xf32>
    %cst_37 = arith.constant 1.000000e+00 : f32
    %123 = vector.broadcast %cst_37 : f32 to vector<8x128xf32>
    %124 = arith.addf %123, %122 : vector<8x128xf32>
    %125 = arith.divf %123, %124 : vector<8x128xf32>
    %126 = arith.select %5, %120, %125 : vector<8x128xi1>, vector<8x128xf32>
    %127 = vector.extract_strided_slice %126 {offsets = [0, 0], sizes = [8, 32], strides = [1, 1]} : vector<8x128xf32> to vector<8x32xf32>
    %128 = vector.extract_strided_slice %126 {offsets = [0, 32], sizes = [8, 32], strides = [1, 1]} : vector<8x128xf32> to vector<8x32xf32>
    %129 = vector.extract_strided_slice %126 {offsets = [0, 64], sizes = [8, 32], strides = [1, 1]} : vector<8x128xf32> to vector<8x32xf32>
    %130 = vector.extract_strided_slice %126 {offsets = [0, 96], sizes = [8, 32], strides = [1, 1]} : vector<8x128xf32> to vector<8x32xf32>
    %131 = arith.mulf %128, %109 : vector<8x32xf32>
    %132 = arith.mulf %127, %129 : vector<8x32xf32>
    %133 = arith.addf %131, %132 : vector<8x32xf32>
    %134 = math.tanh %133 : vector<8x32xf32>
    %135 = arith.mulf %130, %134 : vector<8x32xf32>
    %136 = arith.index_cast %115 : i32 to index
    %c0_38 = arith.constant 0 : index
    %137 = vector.load %arg14[%136, %c0_38] : memref<64x32xf32, #tpu.memory_space<vmem>>, vector<8x32xf32>
    tpu.vector_store %arg14[%136, %c0_38], %135 {strides = array<i32>} : memref<64x32xf32, #tpu.memory_space<vmem>>, vector<8x32xf32>,
    %c5_i32 = arith.constant 5 : i32
    %c8_i32_39 = arith.constant 8 : i32
    %138 = arith.muli %c5_i32, %c8_i32_39 : i32
    %139 = tpu.assume_multiple %138, 8 : i32
    %140 = arith.index_cast %139 : i32 to index
    %c0_40 = arith.constant 0 : index
    %141 = vector.load %arg13[%140, %c0_40] : memref<64x128xf32, #tpu.memory_space<vmem>>, vector<8x128xf32>
    %cst_41 = arith.constant dense<0.000000e+00> : vector<8x128xf32>
    %142 = tpu.matmul %135, %7, %cst_41 {dimension_numbers = #tpu.dot_dimension_numbers<[1], [0], [0], [1], [0, 0, 1, 1], [], []>} : vector<8x32xf32>, vector<32x128xf32>, vector<8x128xf32> -> vector<8x128xf32>
    %143 = arith.addf %141, %142 : vector<8x128xf32>
    %144 = math.tanh %143 : vector<8x128xf32>
    %145 = arith.negf %143 : vector<8x128xf32>
    %146 = math.exp %145 : vector<8x128xf32>
    %cst_42 = arith.constant 1.000000e+00 : f32
    %147 = vector.broadcast %cst_42 : f32 to vector<8x128xf32>
    %148 = arith.addf %147, %146 : vector<8x128xf32>
    %149 = arith.divf %147, %148 : vector<8x128xf32>
    %150 = arith.select %5, %144, %149 : vector<8x128xi1>, vector<8x128xf32>
    %151 = vector.extract_strided_slice %150 {offsets = [0, 0], sizes = [8, 32], strides = [1, 1]} : vector<8x128xf32> to vector<8x32xf32>
    %152 = vector.extract_strided_slice %150 {offsets = [0, 32], sizes = [8, 32], strides = [1, 1]} : vector<8x128xf32> to vector<8x32xf32>
    %153 = vector.extract_strided_slice %150 {offsets = [0, 64], sizes = [8, 32], strides = [1, 1]} : vector<8x128xf32> to vector<8x32xf32>
    %154 = vector.extract_strided_slice %150 {offsets = [0, 96], sizes = [8, 32], strides = [1, 1]} : vector<8x128xf32> to vector<8x32xf32>
    %155 = arith.mulf %152, %133 : vector<8x32xf32>
    %156 = arith.mulf %151, %153 : vector<8x32xf32>
    %157 = arith.addf %155, %156 : vector<8x32xf32>
    %158 = math.tanh %157 : vector<8x32xf32>
    %159 = arith.mulf %154, %158 : vector<8x32xf32>
    %160 = arith.index_cast %139 : i32 to index
    %c0_43 = arith.constant 0 : index
    %161 = vector.load %arg14[%160, %c0_43] : memref<64x32xf32, #tpu.memory_space<vmem>>, vector<8x32xf32>
    tpu.vector_store %arg14[%160, %c0_43], %159 {strides = array<i32>} : memref<64x32xf32, #tpu.memory_space<vmem>>, vector<8x32xf32>,
    %c6_i32 = arith.constant 6 : i32
    %c8_i32_44 = arith.constant 8 : i32
    %162 = arith.muli %c6_i32, %c8_i32_44 : i32
    %163 = tpu.assume_multiple %162, 8 : i32
    %164 = arith.index_cast %163 : i32 to index
    %c0_45 = arith.constant 0 : index
    %165 = vector.load %arg13[%164, %c0_45] : memref<64x128xf32, #tpu.memory_space<vmem>>, vector<8x128xf32>
    %cst_46 = arith.constant dense<0.000000e+00> : vector<8x128xf32>
    %166 = tpu.matmul %159, %7, %cst_46 {dimension_numbers = #tpu.dot_dimension_numbers<[1], [0], [0], [1], [0, 0, 1, 1], [], []>} : vector<8x32xf32>, vector<32x128xf32>, vector<8x128xf32> -> vector<8x128xf32>
    %167 = arith.addf %165, %166 : vector<8x128xf32>
    %168 = math.tanh %167 : vector<8x128xf32>
    %169 = arith.negf %167 : vector<8x128xf32>
    %170 = math.exp %169 : vector<8x128xf32>
    %cst_47 = arith.constant 1.000000e+00 : f32
    %171 = vector.broadcast %cst_47 : f32 to vector<8x128xf32>
    %172 = arith.addf %171, %170 : vector<8x128xf32>
    %173 = arith.divf %171, %172 : vector<8x128xf32>
    %174 = arith.select %5, %168, %173 : vector<8x128xi1>, vector<8x128xf32>
    %175 = vector.extract_strided_slice %174 {offsets = [0, 0], sizes = [8, 32], strides = [1, 1]} : vector<8x128xf32> to vector<8x32xf32>
    %176 = vector.extract_strided_slice %174 {offsets = [0, 32], sizes = [8, 32], strides = [1, 1]} : vector<8x128xf32> to vector<8x32xf32>
    %177 = vector.extract_strided_slice %174 {offsets = [0, 64], sizes = [8, 32], strides = [1, 1]} : vector<8x128xf32> to vector<8x32xf32>
    %178 = vector.extract_strided_slice %174 {offsets = [0, 96], sizes = [8, 32], strides = [1, 1]} : vector<8x128xf32> to vector<8x32xf32>
    %179 = arith.mulf %176, %157 : vector<8x32xf32>
    %180 = arith.mulf %175, %177 : vector<8x32xf32>
    %181 = arith.addf %179, %180 : vector<8x32xf32>
    %182 = math.tanh %181 : vector<8x32xf32>
    %183 = arith.mulf %178, %182 : vector<8x32xf32>
    %184 = arith.index_cast %163 : i32 to index
    %c0_48 = arith.constant 0 : index
    %185 = vector.load %arg14[%184, %c0_48] : memref<64x32xf32, #tpu.memory_space<vmem>>, vector<8x32xf32>
    tpu.vector_store %arg14[%184, %c0_48], %183 {strides = array<i32>} : memref<64x32xf32, #tpu.memory_space<vmem>>, vector<8x32xf32>,
    %c7_i32 = arith.constant 7 : i32
    %c8_i32_49 = arith.constant 8 : i32
    %186 = arith.muli %c7_i32, %c8_i32_49 : i32
    %187 = tpu.assume_multiple %186, 8 : i32
    %188 = arith.index_cast %187 : i32 to index
    %c0_50 = arith.constant 0 : index
    %189 = vector.load %arg13[%188, %c0_50] : memref<64x128xf32, #tpu.memory_space<vmem>>, vector<8x128xf32>
    %cst_51 = arith.constant dense<0.000000e+00> : vector<8x128xf32>
    %190 = tpu.matmul %183, %7, %cst_51 {dimension_numbers = #tpu.dot_dimension_numbers<[1], [0], [0], [1], [0, 0, 1, 1], [], []>} : vector<8x32xf32>, vector<32x128xf32>, vector<8x128xf32> -> vector<8x128xf32>
    %191 = arith.addf %189, %190 : vector<8x128xf32>
    %192 = math.tanh %191 : vector<8x128xf32>
    %193 = arith.negf %191 : vector<8x128xf32>
    %194 = math.exp %193 : vector<8x128xf32>
    %cst_52 = arith.constant 1.000000e+00 : f32
    %195 = vector.broadcast %cst_52 : f32 to vector<8x128xf32>
    %196 = arith.addf %195, %194 : vector<8x128xf32>
    %197 = arith.divf %195, %196 : vector<8x128xf32>
    %198 = arith.select %5, %192, %197 : vector<8x128xi1>, vector<8x128xf32>
    %199 = vector.extract_strided_slice %198 {offsets = [0, 0], sizes = [8, 32], strides = [1, 1]} : vector<8x128xf32> to vector<8x32xf32>
    %200 = vector.extract_strided_slice %198 {offsets = [0, 32], sizes = [8, 32], strides = [1, 1]} : vector<8x128xf32> to vector<8x32xf32>
    %201 = vector.extract_strided_slice %198 {offsets = [0, 64], sizes = [8, 32], strides = [1, 1]} : vector<8x128xf32> to vector<8x32xf32>
    %202 = vector.extract_strided_slice %198 {offsets = [0, 96], sizes = [8, 32], strides = [1, 1]} : vector<8x128xf32> to vector<8x32xf32>
    %203 = arith.mulf %200, %181 : vector<8x32xf32>
    %204 = arith.mulf %199, %201 : vector<8x32xf32>
    %205 = arith.addf %203, %204 : vector<8x32xf32>
    %206 = math.tanh %205 : vector<8x32xf32>
    %207 = arith.mulf %202, %206 : vector<8x32xf32>
    %208 = arith.index_cast %187 : i32 to index
    %c0_53 = arith.constant 0 : index
    %209 = vector.load %arg14[%208, %c0_53] : memref<64x32xf32, #tpu.memory_space<vmem>>, vector<8x32xf32>
    tpu.vector_store %arg14[%208, %c0_53], %207 {strides = array<i32>} : memref<64x32xf32, #tpu.memory_space<vmem>>, vector<8x32xf32>,
    %c8_i32_54 = arith.constant 8 : i32
    %c0_55 = arith.constant 0 : index
    %c0_56 = arith.constant 0 : index
    %c0_57 = arith.constant 0 : index
    %210 = vector.load %arg11[%c0_55, %c0_56, %c0_57] : memref<2x8x32xf32, #tpu.memory_space<vmem>>, vector<1x8x32xf32>
    %211 = vector.shape_cast %210 : vector<1x8x32xf32> to vector<8x32xf32>
    %212 = vector.shape_cast %207 : vector<8x32xf32> to vector<1x8x32xf32>
    tpu.vector_store %arg11[%c0_55, %c0_56, %c0_57], %212 {strides = array<i32>} : memref<2x8x32xf32, #tpu.memory_space<vmem>>, vector<1x8x32xf32>,
    %c0_58 = arith.constant 0 : index
    %c0_59 = arith.constant 0 : index
    %c0_60 = arith.constant 0 : index
    %213 = vector.load %arg12[%c0_58, %c0_59, %c0_60] : memref<2x8x32xf32, #tpu.memory_space<vmem>>, vector<1x8x32xf32>
    %214 = vector.shape_cast %213 : vector<1x8x32xf32> to vector<8x32xf32>
    %215 = vector.shape_cast %205 : vector<8x32xf32> to vector<1x8x32xf32>
    tpu.vector_store %arg12[%c0_58, %c0_59, %c0_60], %215 {strides = array<i32>} : memref<2x8x32xf32, #tpu.memory_space<vmem>>, vector<1x8x32xf32>,
    %c0_61 = arith.constant 0 : index
    %c0_62 = arith.constant 0 : index
    %216 = vector.load %arg5[%c0_61, %c0_62] : memref<32x128xf32, #tpu.memory_space<vmem>>, vector<32x128xf32>
    %c0_63 = arith.constant 0 : index
    %c0_64 = arith.constant 0 : index
    %217 = vector.load %arg6[%c0_63, %c0_64] : memref<32x128xf32, #tpu.memory_space<vmem>>, vector<32x128xf32>
    %c0_65 = arith.constant 0 : index
    %c0_66 = arith.constant 0 : index
    %218 = vector.load %arg7[%c0_65, %c0_66] : memref<1x128xf32, #tpu.memory_space<vmem>>, vector<1x128xf32>
    %c0_67 = arith.constant 0 : index
    %c0_68 = arith.constant 0 : index
    %219 = vector.load %arg14[%c0_67, %c0_68] : memref<64x32xf32, #tpu.memory_space<vmem>>, vector<64x32xf32>
    %cst_69 = arith.constant dense<0.000000e+00> : vector<64x128xf32>
    %220 = tpu.matmul %219, %216, %cst_69 {dimension_numbers = #tpu.dot_dimension_numbers<[1], [0], [0], [1], [0, 0, 1, 1], [], []>} : vector<64x32xf32>, vector<32x128xf32>, vector<64x128xf32> -> vector<64x128xf32>
    %221 = vector.broadcast %218 : vector<1x128xf32> to vector<64x128xf32>
    %222 = arith.addf %220, %221 : vector<64x128xf32>
    %c0_70 = arith.constant 0 : index
    %c0_71 = arith.constant 0 : index
    %223 = vector.load %arg13[%c0_70, %c0_71] : memref<64x128xf32, #tpu.memory_space<vmem>>, vector<64x128xf32>
    tpu.vector_store %arg13[%c0_70, %c0_71], %222 {strides = array<i32>} : memref<64x128xf32, #tpu.memory_space<vmem>>, vector<64x128xf32>,
    %c1 = arith.constant 1 : index
    %c0_72 = arith.constant 0 : index
    %c0_73 = arith.constant 0 : index
    %224 = vector.load %arg8[%c1, %c0_72, %c0_73] : memref<2x8x32xf32, #tpu.memory_space<vmem>>, vector<1x8x32xf32>
    %225 = vector.shape_cast %224 : vector<1x8x32xf32> to vector<8x32xf32>
    %c1_74 = arith.constant 1 : index
    %c0_75 = arith.constant 0 : index
    %c0_76 = arith.constant 0 : index
    %226 = vector.load %arg9[%c1_74, %c0_75, %c0_76] : memref<2x8x32xf32, #tpu.memory_space<vmem>>, vector<1x8x32xf32>
    %227 = vector.shape_cast %226 : vector<1x8x32xf32> to vector<8x32xf32>
    %c0_i32_77 = arith.constant 0 : i32
    %c8_i32_78 = arith.constant 8 : i32
    %228 = arith.muli %c0_i32_77, %c8_i32_78 : i32
    %229 = tpu.assume_multiple %228, 8 : i32
    %230 = arith.index_cast %229 : i32 to index
    %c0_79 = arith.constant 0 : index
    %231 = vector.load %arg13[%230, %c0_79] : memref<64x128xf32, #tpu.memory_space<vmem>>, vector<8x128xf32>
    %cst_80 = arith.constant dense<0.000000e+00> : vector<8x128xf32>
    %232 = tpu.matmul %225, %217, %cst_80 {dimension_numbers = #tpu.dot_dimension_numbers<[1], [0], [0], [1], [0, 0, 1, 1], [], []>} : vector<8x32xf32>, vector<32x128xf32>, vector<8x128xf32> -> vector<8x128xf32>
    %233 = arith.addf %231, %232 : vector<8x128xf32>
    %234 = math.tanh %233 : vector<8x128xf32>
    %235 = arith.negf %233 : vector<8x128xf32>
    %236 = math.exp %235 : vector<8x128xf32>
    %cst_81 = arith.constant 1.000000e+00 : f32
    %237 = vector.broadcast %cst_81 : f32 to vector<8x128xf32>
    %238 = arith.addf %237, %236 : vector<8x128xf32>
    %239 = arith.divf %237, %238 : vector<8x128xf32>
    %240 = arith.select %5, %234, %239 : vector<8x128xi1>, vector<8x128xf32>
    %241 = vector.extract_strided_slice %240 {offsets = [0, 0], sizes = [8, 32], strides = [1, 1]} : vector<8x128xf32> to vector<8x32xf32>
    %242 = vector.extract_strided_slice %240 {offsets = [0, 32], sizes = [8, 32], strides = [1, 1]} : vector<8x128xf32> to vector<8x32xf32>
    %243 = vector.extract_strided_slice %240 {offsets = [0, 64], sizes = [8, 32], strides = [1, 1]} : vector<8x128xf32> to vector<8x32xf32>
    %244 = vector.extract_strided_slice %240 {offsets = [0, 96], sizes = [8, 32], strides = [1, 1]} : vector<8x128xf32> to vector<8x32xf32>
    %245 = arith.mulf %242, %227 : vector<8x32xf32>
    %246 = arith.mulf %241, %243 : vector<8x32xf32>
    %247 = arith.addf %245, %246 : vector<8x32xf32>
    %248 = math.tanh %247 : vector<8x32xf32>
    %249 = arith.mulf %244, %248 : vector<8x32xf32>
    %250 = arith.index_cast %229 : i32 to index
    %c0_82 = arith.constant 0 : index
    %251 = vector.load %arg14[%250, %c0_82] : memref<64x32xf32, #tpu.memory_space<vmem>>, vector<8x32xf32>
    tpu.vector_store %arg14[%250, %c0_82], %249 {strides = array<i32>} : memref<64x32xf32, #tpu.memory_space<vmem>>, vector<8x32xf32>,
    %c1_i32_83 = arith.constant 1 : i32
    %c8_i32_84 = arith.constant 8 : i32
    %252 = arith.muli %c1_i32_83, %c8_i32_84 : i32
    %253 = tpu.assume_multiple %252, 8 : i32
    %254 = arith.index_cast %253 : i32 to index
    %c0_85 = arith.constant 0 : index
    %255 = vector.load %arg13[%254, %c0_85] : memref<64x128xf32, #tpu.memory_space<vmem>>, vector<8x128xf32>
    %cst_86 = arith.constant dense<0.000000e+00> : vector<8x128xf32>
    %256 = tpu.matmul %249, %217, %cst_86 {dimension_numbers = #tpu.dot_dimension_numbers<[1], [0], [0], [1], [0, 0, 1, 1], [], []>} : vector<8x32xf32>, vector<32x128xf32>, vector<8x128xf32> -> vector<8x128xf32>
    %257 = arith.addf %255, %256 : vector<8x128xf32>
    %258 = math.tanh %257 : vector<8x128xf32>
    %259 = arith.negf %257 : vector<8x128xf32>
    %260 = math.exp %259 : vector<8x128xf32>
    %cst_87 = arith.constant 1.000000e+00 : f32
    %261 = vector.broadcast %cst_87 : f32 to vector<8x128xf32>
    %262 = arith.addf %261, %260 : vector<8x128xf32>
    %263 = arith.divf %261, %262 : vector<8x128xf32>
    %264 = arith.select %5, %258, %263 : vector<8x128xi1>, vector<8x128xf32>
    %265 = vector.extract_strided_slice %264 {offsets = [0, 0], sizes = [8, 32], strides = [1, 1]} : vector<8x128xf32> to vector<8x32xf32>
    %266 = vector.extract_strided_slice %264 {offsets = [0, 32], sizes = [8, 32], strides = [1, 1]} : vector<8x128xf32> to vector<8x32xf32>
    %267 = vector.extract_strided_slice %264 {offsets = [0, 64], sizes = [8, 32], strides = [1, 1]} : vector<8x128xf32> to vector<8x32xf32>
    %268 = vector.extract_strided_slice %264 {offsets = [0, 96], sizes = [8, 32], strides = [1, 1]} : vector<8x128xf32> to vector<8x32xf32>
    %269 = arith.mulf %266, %247 : vector<8x32xf32>
    %270 = arith.mulf %265, %267 : vector<8x32xf32>
    %271 = arith.addf %269, %270 : vector<8x32xf32>
    %272 = math.tanh %271 : vector<8x32xf32>
    %273 = arith.mulf %268, %272 : vector<8x32xf32>
    %274 = arith.index_cast %253 : i32 to index
    %c0_88 = arith.constant 0 : index
    %275 = vector.load %arg14[%274, %c0_88] : memref<64x32xf32, #tpu.memory_space<vmem>>, vector<8x32xf32>
    tpu.vector_store %arg14[%274, %c0_88], %273 {strides = array<i32>} : memref<64x32xf32, #tpu.memory_space<vmem>>, vector<8x32xf32>,
    %c2_i32_89 = arith.constant 2 : i32
    %c8_i32_90 = arith.constant 8 : i32
    %276 = arith.muli %c2_i32_89, %c8_i32_90 : i32
    %277 = tpu.assume_multiple %276, 8 : i32
    %278 = arith.index_cast %277 : i32 to index
    %c0_91 = arith.constant 0 : index
    %279 = vector.load %arg13[%278, %c0_91] : memref<64x128xf32, #tpu.memory_space<vmem>>, vector<8x128xf32>
    %cst_92 = arith.constant dense<0.000000e+00> : vector<8x128xf32>
    %280 = tpu.matmul %273, %217, %cst_92 {dimension_numbers = #tpu.dot_dimension_numbers<[1], [0], [0], [1], [0, 0, 1, 1], [], []>} : vector<8x32xf32>, vector<32x128xf32>, vector<8x128xf32> -> vector<8x128xf32>
    %281 = arith.addf %279, %280 : vector<8x128xf32>
    %282 = math.tanh %281 : vector<8x128xf32>
    %283 = arith.negf %281 : vector<8x128xf32>
    %284 = math.exp %283 : vector<8x128xf32>
    %cst_93 = arith.constant 1.000000e+00 : f32
    %285 = vector.broadcast %cst_93 : f32 to vector<8x128xf32>
    %286 = arith.addf %285, %284 : vector<8x128xf32>
    %287 = arith.divf %285, %286 : vector<8x128xf32>
    %288 = arith.select %5, %282, %287 : vector<8x128xi1>, vector<8x128xf32>
    %289 = vector.extract_strided_slice %288 {offsets = [0, 0], sizes = [8, 32], strides = [1, 1]} : vector<8x128xf32> to vector<8x32xf32>
    %290 = vector.extract_strided_slice %288 {offsets = [0, 32], sizes = [8, 32], strides = [1, 1]} : vector<8x128xf32> to vector<8x32xf32>
    %291 = vector.extract_strided_slice %288 {offsets = [0, 64], sizes = [8, 32], strides = [1, 1]} : vector<8x128xf32> to vector<8x32xf32>
    %292 = vector.extract_strided_slice %288 {offsets = [0, 96], sizes = [8, 32], strides = [1, 1]} : vector<8x128xf32> to vector<8x32xf32>
    %293 = arith.mulf %290, %271 : vector<8x32xf32>
    %294 = arith.mulf %289, %291 : vector<8x32xf32>
    %295 = arith.addf %293, %294 : vector<8x32xf32>
    %296 = math.tanh %295 : vector<8x32xf32>
    %297 = arith.mulf %292, %296 : vector<8x32xf32>
    %298 = arith.index_cast %277 : i32 to index
    %c0_94 = arith.constant 0 : index
    %299 = vector.load %arg14[%298, %c0_94] : memref<64x32xf32, #tpu.memory_space<vmem>>, vector<8x32xf32>
    tpu.vector_store %arg14[%298, %c0_94], %297 {strides = array<i32>} : memref<64x32xf32, #tpu.memory_space<vmem>>, vector<8x32xf32>,
    %c3_i32_95 = arith.constant 3 : i32
    %c8_i32_96 = arith.constant 8 : i32
    %300 = arith.muli %c3_i32_95, %c8_i32_96 : i32
    %301 = tpu.assume_multiple %300, 8 : i32
    %302 = arith.index_cast %301 : i32 to index
    %c0_97 = arith.constant 0 : index
    %303 = vector.load %arg13[%302, %c0_97] : memref<64x128xf32, #tpu.memory_space<vmem>>, vector<8x128xf32>
    %cst_98 = arith.constant dense<0.000000e+00> : vector<8x128xf32>
    %304 = tpu.matmul %297, %217, %cst_98 {dimension_numbers = #tpu.dot_dimension_numbers<[1], [0], [0], [1], [0, 0, 1, 1], [], []>} : vector<8x32xf32>, vector<32x128xf32>, vector<8x128xf32> -> vector<8x128xf32>
    %305 = arith.addf %303, %304 : vector<8x128xf32>
    %306 = math.tanh %305 : vector<8x128xf32>
    %307 = arith.negf %305 : vector<8x128xf32>
    %308 = math.exp %307 : vector<8x128xf32>
    %cst_99 = arith.constant 1.000000e+00 : f32
    %309 = vector.broadcast %cst_99 : f32 to vector<8x128xf32>
    %310 = arith.addf %309, %308 : vector<8x128xf32>
    %311 = arith.divf %309, %310 : vector<8x128xf32>
    %312 = arith.select %5, %306, %311 : vector<8x128xi1>, vector<8x128xf32>
    %313 = vector.extract_strided_slice %312 {offsets = [0, 0], sizes = [8, 32], strides = [1, 1]} : vector<8x128xf32> to vector<8x32xf32>
    %314 = vector.extract_strided_slice %312 {offsets = [0, 32], sizes = [8, 32], strides = [1, 1]} : vector<8x128xf32> to vector<8x32xf32>
    %315 = vector.extract_strided_slice %312 {offsets = [0, 64], sizes = [8, 32], strides = [1, 1]} : vector<8x128xf32> to vector<8x32xf32>
    %316 = vector.extract_strided_slice %312 {offsets = [0, 96], sizes = [8, 32], strides = [1, 1]} : vector<8x128xf32> to vector<8x32xf32>
    %317 = arith.mulf %314, %295 : vector<8x32xf32>
    %318 = arith.mulf %313, %315 : vector<8x32xf32>
    %319 = arith.addf %317, %318 : vector<8x32xf32>
    %320 = math.tanh %319 : vector<8x32xf32>
    %321 = arith.mulf %316, %320 : vector<8x32xf32>
    %322 = arith.index_cast %301 : i32 to index
    %c0_100 = arith.constant 0 : index
    %323 = vector.load %arg14[%322, %c0_100] : memref<64x32xf32, #tpu.memory_space<vmem>>, vector<8x32xf32>
    tpu.vector_store %arg14[%322, %c0_100], %321 {strides = array<i32>} : memref<64x32xf32, #tpu.memory_space<vmem>>, vector<8x32xf32>,
    %c4_i32_101 = arith.constant 4 : i32
    %c8_i32_102 = arith.constant 8 : i32
    %324 = arith.muli %c4_i32_101, %c8_i32_102 : i32
    %325 = tpu.assume_multiple %324, 8 : i32
    %326 = arith.index_cast %325 : i32 to index
    %c0_103 = arith.constant 0 : index
    %327 = vector.load %arg13[%326, %c0_103] : memref<64x128xf32, #tpu.memory_space<vmem>>, vector<8x128xf32>
    %cst_104 = arith.constant dense<0.000000e+00> : vector<8x128xf32>
    %328 = tpu.matmul %321, %217, %cst_104 {dimension_numbers = #tpu.dot_dimension_numbers<[1], [0], [0], [1], [0, 0, 1, 1], [], []>} : vector<8x32xf32>, vector<32x128xf32>, vector<8x128xf32> -> vector<8x128xf32>
    %329 = arith.addf %327, %328 : vector<8x128xf32>
    %330 = math.tanh %329 : vector<8x128xf32>
    %331 = arith.negf %329 : vector<8x128xf32>
    %332 = math.exp %331 : vector<8x128xf32>
    %cst_105 = arith.constant 1.000000e+00 : f32
    %333 = vector.broadcast %cst_105 : f32 to vector<8x128xf32>
    %334 = arith.addf %333, %332 : vector<8x128xf32>
    %335 = arith.divf %333, %334 : vector<8x128xf32>
    %336 = arith.select %5, %330, %335 : vector<8x128xi1>, vector<8x128xf32>
    %337 = vector.extract_strided_slice %336 {offsets = [0, 0], sizes = [8, 32], strides = [1, 1]} : vector<8x128xf32> to vector<8x32xf32>
    %338 = vector.extract_strided_slice %336 {offsets = [0, 32], sizes = [8, 32], strides = [1, 1]} : vector<8x128xf32> to vector<8x32xf32>
    %339 = vector.extract_strided_slice %336 {offsets = [0, 64], sizes = [8, 32], strides = [1, 1]} : vector<8x128xf32> to vector<8x32xf32>
    %340 = vector.extract_strided_slice %336 {offsets = [0, 96], sizes = [8, 32], strides = [1, 1]} : vector<8x128xf32> to vector<8x32xf32>
    %341 = arith.mulf %338, %319 : vector<8x32xf32>
    %342 = arith.mulf %337, %339 : vector<8x32xf32>
    %343 = arith.addf %341, %342 : vector<8x32xf32>
    %344 = math.tanh %343 : vector<8x32xf32>
    %345 = arith.mulf %340, %344 : vector<8x32xf32>
    %346 = arith.index_cast %325 : i32 to index
    %c0_106 = arith.constant 0 : index
    %347 = vector.load %arg14[%346, %c0_106] : memref<64x32xf32, #tpu.memory_space<vmem>>, vector<8x32xf32>
    tpu.vector_store %arg14[%346, %c0_106], %345 {strides = array<i32>} : memref<64x32xf32, #tpu.memory_space<vmem>>, vector<8x32xf32>,
    %c5_i32_107 = arith.constant 5 : i32
    %c8_i32_108 = arith.constant 8 : i32
    %348 = arith.muli %c5_i32_107, %c8_i32_108 : i32
    %349 = tpu.assume_multiple %348, 8 : i32
    %350 = arith.index_cast %349 : i32 to index
    %c0_109 = arith.constant 0 : index
    %351 = vector.load %arg13[%350, %c0_109] : memref<64x128xf32, #tpu.memory_space<vmem>>, vector<8x128xf32>
    %cst_110 = arith.constant dense<0.000000e+00> : vector<8x128xf32>
    %352 = tpu.matmul %345, %217, %cst_110 {dimension_numbers = #tpu.dot_dimension_numbers<[1], [0], [0], [1], [0, 0, 1, 1], [], []>} : vector<8x32xf32>, vector<32x128xf32>, vector<8x128xf32> -> vector<8x128xf32>
    %353 = arith.addf %351, %352 : vector<8x128xf32>
    %354 = math.tanh %353 : vector<8x128xf32>
    %355 = arith.negf %353 : vector<8x128xf32>
    %356 = math.exp %355 : vector<8x128xf32>
    %cst_111 = arith.constant 1.000000e+00 : f32
    %357 = vector.broadcast %cst_111 : f32 to vector<8x128xf32>
    %358 = arith.addf %357, %356 : vector<8x128xf32>
    %359 = arith.divf %357, %358 : vector<8x128xf32>
    %360 = arith.select %5, %354, %359 : vector<8x128xi1>, vector<8x128xf32>
    %361 = vector.extract_strided_slice %360 {offsets = [0, 0], sizes = [8, 32], strides = [1, 1]} : vector<8x128xf32> to vector<8x32xf32>
    %362 = vector.extract_strided_slice %360 {offsets = [0, 32], sizes = [8, 32], strides = [1, 1]} : vector<8x128xf32> to vector<8x32xf32>
    %363 = vector.extract_strided_slice %360 {offsets = [0, 64], sizes = [8, 32], strides = [1, 1]} : vector<8x128xf32> to vector<8x32xf32>
    %364 = vector.extract_strided_slice %360 {offsets = [0, 96], sizes = [8, 32], strides = [1, 1]} : vector<8x128xf32> to vector<8x32xf32>
    %365 = arith.mulf %362, %343 : vector<8x32xf32>
    %366 = arith.mulf %361, %363 : vector<8x32xf32>
    %367 = arith.addf %365, %366 : vector<8x32xf32>
    %368 = math.tanh %367 : vector<8x32xf32>
    %369 = arith.mulf %364, %368 : vector<8x32xf32>
    %370 = arith.index_cast %349 : i32 to index
    %c0_112 = arith.constant 0 : index
    %371 = vector.load %arg14[%370, %c0_112] : memref<64x32xf32, #tpu.memory_space<vmem>>, vector<8x32xf32>
    tpu.vector_store %arg14[%370, %c0_112], %369 {strides = array<i32>} : memref<64x32xf32, #tpu.memory_space<vmem>>, vector<8x32xf32>,
    %c6_i32_113 = arith.constant 6 : i32
    %c8_i32_114 = arith.constant 8 : i32
    %372 = arith.muli %c6_i32_113, %c8_i32_114 : i32
    %373 = tpu.assume_multiple %372, 8 : i32
    %374 = arith.index_cast %373 : i32 to index
    %c0_115 = arith.constant 0 : index
    %375 = vector.load %arg13[%374, %c0_115] : memref<64x128xf32, #tpu.memory_space<vmem>>, vector<8x128xf32>
    %cst_116 = arith.constant dense<0.000000e+00> : vector<8x128xf32>
    %376 = tpu.matmul %369, %217, %cst_116 {dimension_numbers = #tpu.dot_dimension_numbers<[1], [0], [0], [1], [0, 0, 1, 1], [], []>} : vector<8x32xf32>, vector<32x128xf32>, vector<8x128xf32> -> vector<8x128xf32>
    %377 = arith.addf %375, %376 : vector<8x128xf32>
    %378 = math.tanh %377 : vector<8x128xf32>
    %379 = arith.negf %377 : vector<8x128xf32>
    %380 = math.exp %379 : vector<8x128xf32>
    %cst_117 = arith.constant 1.000000e+00 : f32
    %381 = vector.broadcast %cst_117 : f32 to vector<8x128xf32>
    %382 = arith.addf %381, %380 : vector<8x128xf32>
    %383 = arith.divf %381, %382 : vector<8x128xf32>
    %384 = arith.select %5, %378, %383 : vector<8x128xi1>, vector<8x128xf32>
    %385 = vector.extract_strided_slice %384 {offsets = [0, 0], sizes = [8, 32], strides = [1, 1]} : vector<8x128xf32> to vector<8x32xf32>
    %386 = vector.extract_strided_slice %384 {offsets = [0, 32], sizes = [8, 32], strides = [1, 1]} : vector<8x128xf32> to vector<8x32xf32>
    %387 = vector.extract_strided_slice %384 {offsets = [0, 64], sizes = [8, 32], strides = [1, 1]} : vector<8x128xf32> to vector<8x32xf32>
    %388 = vector.extract_strided_slice %384 {offsets = [0, 96], sizes = [8, 32], strides = [1, 1]} : vector<8x128xf32> to vector<8x32xf32>
    %389 = arith.mulf %386, %367 : vector<8x32xf32>
    %390 = arith.mulf %385, %387 : vector<8x32xf32>
    %391 = arith.addf %389, %390 : vector<8x32xf32>
    %392 = math.tanh %391 : vector<8x32xf32>
    %393 = arith.mulf %388, %392 : vector<8x32xf32>
    %394 = arith.index_cast %373 : i32 to index
    %c0_118 = arith.constant 0 : index
    %395 = vector.load %arg14[%394, %c0_118] : memref<64x32xf32, #tpu.memory_space<vmem>>, vector<8x32xf32>
    tpu.vector_store %arg14[%394, %c0_118], %393 {strides = array<i32>} : memref<64x32xf32, #tpu.memory_space<vmem>>, vector<8x32xf32>,
    %c7_i32_119 = arith.constant 7 : i32
    %c8_i32_120 = arith.constant 8 : i32
    %396 = arith.muli %c7_i32_119, %c8_i32_120 : i32
    %397 = tpu.assume_multiple %396, 8 : i32
    %398 = arith.index_cast %397 : i32 to index
    %c0_121 = arith.constant 0 : index
    %399 = vector.load %arg13[%398, %c0_121] : memref<64x128xf32, #tpu.memory_space<vmem>>, vector<8x128xf32>
    %cst_122 = arith.constant dense<0.000000e+00> : vector<8x128xf32>
    %400 = tpu.matmul %393, %217, %cst_122 {dimension_numbers = #tpu.dot_dimension_numbers<[1], [0], [0], [1], [0, 0, 1, 1], [], []>} : vector<8x32xf32>, vector<32x128xf32>, vector<8x128xf32> -> vector<8x128xf32>
    %401 = arith.addf %399, %400 : vector<8x128xf32>
    %402 = math.tanh %401 : vector<8x128xf32>
    %403 = arith.negf %401 : vector<8x128xf32>
    %404 = math.exp %403 : vector<8x128xf32>
    %cst_123 = arith.constant 1.000000e+00 : f32
    %405 = vector.broadcast %cst_123 : f32 to vector<8x128xf32>
    %406 = arith.addf %405, %404 : vector<8x128xf32>
    %407 = arith.divf %405, %406 : vector<8x128xf32>
    %408 = arith.select %5, %402, %407 : vector<8x128xi1>, vector<8x128xf32>
    %409 = vector.extract_strided_slice %408 {offsets = [0, 0], sizes = [8, 32], strides = [1, 1]} : vector<8x128xf32> to vector<8x32xf32>
    %410 = vector.extract_strided_slice %408 {offsets = [0, 32], sizes = [8, 32], strides = [1, 1]} : vector<8x128xf32> to vector<8x32xf32>
    %411 = vector.extract_strided_slice %408 {offsets = [0, 64], sizes = [8, 32], strides = [1, 1]} : vector<8x128xf32> to vector<8x32xf32>
    %412 = vector.extract_strided_slice %408 {offsets = [0, 96], sizes = [8, 32], strides = [1, 1]} : vector<8x128xf32> to vector<8x32xf32>
    %413 = arith.mulf %410, %391 : vector<8x32xf32>
    %414 = arith.mulf %409, %411 : vector<8x32xf32>
    %415 = arith.addf %413, %414 : vector<8x32xf32>
    %416 = math.tanh %415 : vector<8x32xf32>
    %417 = arith.mulf %412, %416 : vector<8x32xf32>
    %418 = arith.index_cast %397 : i32 to index
    %c0_124 = arith.constant 0 : index
    %419 = vector.load %arg14[%418, %c0_124] : memref<64x32xf32, #tpu.memory_space<vmem>>, vector<8x32xf32>
    tpu.vector_store %arg14[%418, %c0_124], %417 {strides = array<i32>} : memref<64x32xf32, #tpu.memory_space<vmem>>, vector<8x32xf32>,
    %c8_i32_125 = arith.constant 8 : i32
    %c1_126 = arith.constant 1 : index
    %c0_127 = arith.constant 0 : index
    %c0_128 = arith.constant 0 : index
    %420 = vector.load %arg11[%c1_126, %c0_127, %c0_128] : memref<2x8x32xf32, #tpu.memory_space<vmem>>, vector<1x8x32xf32>
    %421 = vector.shape_cast %420 : vector<1x8x32xf32> to vector<8x32xf32>
    %422 = vector.shape_cast %417 : vector<8x32xf32> to vector<1x8x32xf32>
    tpu.vector_store %arg11[%c1_126, %c0_127, %c0_128], %422 {strides = array<i32>} : memref<2x8x32xf32, #tpu.memory_space<vmem>>, vector<1x8x32xf32>,
    %c1_129 = arith.constant 1 : index
    %c0_130 = arith.constant 0 : index
    %c0_131 = arith.constant 0 : index
    %423 = vector.load %arg12[%c1_129, %c0_130, %c0_131] : memref<2x8x32xf32, #tpu.memory_space<vmem>>, vector<1x8x32xf32>
    %424 = vector.shape_cast %423 : vector<1x8x32xf32> to vector<8x32xf32>
    %425 = vector.shape_cast %415 : vector<8x32xf32> to vector<1x8x32xf32>
    tpu.vector_store %arg12[%c1_129, %c0_130, %c0_131], %425 {strides = array<i32>} : memref<2x8x32xf32, #tpu.memory_space<vmem>>, vector<1x8x32xf32>,
    %c0_132 = arith.constant 0 : index
    %c0_133 = arith.constant 0 : index
    %426 = vector.load %arg14[%c0_132, %c0_133] : memref<64x32xf32, #tpu.memory_space<vmem>>, vector<64x32xf32>
    %c0_134 = arith.constant 0 : index
    %c0_135 = arith.constant 0 : index
    %427 = vector.load %arg10[%c0_134, %c0_135] : memref<64x32xf32, #tpu.memory_space<vmem>>, vector<64x32xf32>
    tpu.vector_store %arg10[%c0_134, %c0_135], %426 {strides = array<i32>} : memref<64x32xf32, #tpu.memory_space<vmem>>, vector<64x32xf32>,
    return
  }
  func.func @transform_0(%arg0: i32) -> (i32, i32) {
    %c0_i32 = arith.constant 0 : i32
    %c0_i32_0 = arith.constant 0 : i32
    %c0_i32_1 = arith.constant 0 : i32
    return %c0_i32, %c0_i32_0 : i32, i32
  }
  func.func @transform_1(%arg0: i32) -> (i32, i32) {
    %c0_i32 = arith.constant 0 : i32
    %c0_i32_0 = arith.constant 0 : i32
    %c0_i32_1 = arith.constant 0 : i32
    return %c0_i32, %c0_i32_0 : i32, i32
  }
  func.func @transform_2(%arg0: i32) -> (i32, i32) {
    %c0_i32 = arith.constant 0 : i32
    %c0_i32_0 = arith.constant 0 : i32
    %c0_i32_1 = arith.constant 0 : i32
    return %c0_i32, %c0_i32_0 : i32, i32
  }
  func.func @transform_3(%arg0: i32) -> (i32, i32) {
    %c0_i32 = arith.constant 0 : i32
    %c0_i32_0 = arith.constant 0 : i32
    %c0_i32_1 = arith.constant 0 : i32
    return %c0_i32, %c0_i32_0 : i32, i32
  }
  func.func @transform_4(%arg0: i32) -> (i32, i32) {
    %c0_i32 = arith.constant 0 : i32
    %c0_i32_0 = arith.constant 0 : i32
    %c0_i32_1 = arith.constant 0 : i32
    return %c0_i32, %c0_i32_0 : i32, i32
  }
  func.func @transform_5(%arg0: i32) -> (i32, i32) {
    %c0_i32 = arith.constant 0 : i32
    %c0_i32_0 = arith.constant 0 : i32
    %c0_i32_1 = arith.constant 0 : i32
    return %c0_i32, %c0_i32_0 : i32, i32
  }
  func.func @transform_6(%arg0: i32) -> (i32, i32) {
    %c0_i32 = arith.constant 0 : i32
    %c0_i32_0 = arith.constant 0 : i32
    %c0_i32_1 = arith.constant 0 : i32
    return %c0_i32, %c0_i32_0 : i32, i32
  }
  func.func @transform_7(%arg0: i32) -> (i32, i32, i32) {
    %c0_i32 = arith.constant 0 : i32
    %c0_i32_0 = arith.constant 0 : i32
    %c0_i32_1 = arith.constant 0 : i32
    %c0_i32_2 = arith.constant 0 : i32
    return %c0_i32, %c0_i32_0, %c0_i32_1 : i32, i32, i32
  }
  func.func @transform_8(%arg0: i32) -> (i32, i32, i32) {
    %c0_i32 = arith.constant 0 : i32
    %c0_i32_0 = arith.constant 0 : i32
    %c0_i32_1 = arith.constant 0 : i32
    %c0_i32_2 = arith.constant 0 : i32
    return %c0_i32, %c0_i32_0, %c0_i32_1 : i32, i32, i32
  }
  func.func @transform_9(%arg0: i32) -> (i32, i32) {
    %c0_i32 = arith.constant 0 : i32
    %c0_i32_0 = arith.constant 0 : i32
    %c0_i32_1 = arith.constant 0 : i32
    return %c0_i32, %c0_i32_0 : i32, i32
  }
  func.func @transform_10(%arg0: i32) -> (i32, i32, i32) {
    %c0_i32 = arith.constant 0 : i32
    %c0_i32_0 = arith.constant 0 : i32
    %c0_i32_1 = arith.constant 0 : i32
    %c0_i32_2 = arith.constant 0 : i32
    return %c0_i32, %c0_i32_0, %c0_i32_1 : i32, i32, i32
  }
  func.func @transform_11(%arg0: i32) -> (i32, i32, i32) {
    %c0_i32 = arith.constant 0 : i32
    %c0_i32_0 = arith.constant 0 : i32
    %c0_i32_1 = arith.constant 0 : i32
    %c0_i32_2 = arith.constant 0 : i32
    return %c0_i32, %c0_i32_0, %c0_i32_1 : i32, i32, i32
  }
}

</mosaic_0001>

<llo_original>
// kernel: tpu_custom_call.1
$region0: #{tpu_custom_call.1}
  #allocation0 [shape = 'u32[]', space=smem, size = 0x4, offset = 0x4, fixed_abs, tag = 'smem constant byte address 0x4 - core index']
  #allocation1 [shape = 'u32[144,128]{1,0:T(1,128)}', space=vmem, size = 0x12000, scoped, tag = 'internal scratch']
  #allocation2 [shape = 'f32[64,128]{1,0:T(8,128)}', space=vmem, size = 0x8000, scoped, tag = 'scratch operand']
  #allocation3 [shape = 'f32[64,32]{1,0:T(8,128)}', space=vmem, size = 0x8000, scoped, tag = 'scratch operand']
  %s0 = inlined_call_operand.vmem [shape: f32[64,32], index: 0, kind: input, shape index: {}]
  %s1 = inlined_call_operand.vmem [shape: f32[32,128], index: 1, kind: input, shape index: {}]
  %s2 = inlined_call_operand.vmem [shape: f32[32,128], index: 2, kind: input, shape index: {}]
  %s3 = inlined_call_operand.vmem [shape: f32[1,128], index: 3, kind: input, shape index: {}]
  %s4 = inlined_call_operand.vmem [shape: f32[32,128], index: 4, kind: input, shape index: {}]
  %s5 = inlined_call_operand.hbm [shape: f32[32,128], index: 5, kind: input, shape index: {}]
  %s6 = inlined_call_operand.vmem [shape: f32[1,128], index: 6, kind: input, shape index: {}]
  %s7 = inlined_call_operand.vmem [shape: f32[2,8,32], index: 7, kind: input, shape index: {}]
  %s8 = inlined_call_operand.hbm [shape: f32[2,8,32], index: 8, kind: input, shape index: {}]
  %s9 = inlined_call_operand.vmem [shape: f32[64,32], index: 9, kind: output, shape index: {0}]
  %s10 = inlined_call_operand.hbm [shape: f32[2,8,32], index: 10, kind: output, shape index: {1}]
  %s11 = inlined_call_operand.hbm [shape: f32[2,8,32], index: 11, kind: output, shape index: {2}]
  %12 = xla_tuple %s9, %s10, %s11
  %s13 = sld [smem:[#allocation0]]
  $region70: #{tpu_custom_call.1} parent=0
    _
  %s15 = ssub.s32 1, %s13
  %s16 = scalar_select 0, %s15, %s13
  $region1: #{tpu_custom_call.1} parent=0
    #allocation4 [shape = 'u8[16384]{0}', space=vmem, size = 0x4000, scoped, tag = 'input window, operand 5, single buffered']
    #allocation5 [shape = 's32[1]{0}', space=sflag, size = 0x4, scoped, tag = 'scoped memory for tpu_custom_call.1']
    #allocation6 [shape = 's32[1]{0}', space=sflag, size = 0x4, scoped, tag = 'scoped memory for tpu_custom_call.1']
    #allocation7 [shape = 'u8[8192]{0}', space=vmem, size = 0x2000, scoped, tag = 'input window, operand 8, single buffered']
    #allocation8 [shape = 's32[1]{0}', space=sflag, size = 0x4, scoped, tag = 'scoped memory for tpu_custom_call.1']
    #allocation9 [shape = 'u8[8192]{0}', space=vmem, size = 0x2000, scoped, tag = 'output window, operand 1, single buffered']
    #allocation10 [shape = 'u8[8192]{0}', space=vmem, size = 0x2000, scoped, tag = 'output window, operand 2, single buffered']
    #allocation11 [shape = 's32[1]{0}', space=sflag, size = 0x4, scoped, tag = 'scoped memory for tpu_custom_call.1']
    %17 = vsyncpa [#allocation5], 0
    %18 = vsyncpa [#allocation8], 0
    %19 = vsyncpa [#allocation6], 0
    %20 = vsyncpa [#allocation11], 0
    // Predicated region
    $region2: #{tpu_custom_call.1} parent=1 // pred_check
      _
    $region3: #{tpu_custom_call.1} parent=1 // pred_check_branch
      %22 = sbr.rel (0) target = $region5
    $region4: #{tpu_custom_call.1} parent=1 // pred_region
      _
    $region5: #{tpu_custom_call.1} parent=1 // pred_fallthru
      _
    // Predicated region
    $region6: #{tpu_custom_call.1} parent=1 // pred_check
      _
    $region7: #{tpu_custom_call.1} parent=1 // pred_check_branch
      %24 = sbr.rel (0) target = $region9
    $region8: #{tpu_custom_call.1} parent=1 // pred_region
      _
    $region9: #{tpu_custom_call.1} parent=1 // pred_fallthru
      _
    // Predicated region
    $region10: #{tpu_custom_call.1} parent=1 // pred_check
      _
    $region11: #{tpu_custom_call.1} parent=1 // pred_check_branch
      %26 = sbr.rel (0) target = $region13
    $region12: #{tpu_custom_call.1} parent=1 // pred_region
      _
    $region13: #{tpu_custom_call.1} parent=1 // pred_fallthru
      _
    // Predicated region
    $region14: #{tpu_custom_call.1} parent=1 // pred_check
      _
    $region15: #{tpu_custom_call.1} parent=1 // pred_check_branch
      %28 = sbr.rel (0) target = $region17
    $region16: #{tpu_custom_call.1} parent=1 // pred_region
      _
    $region17: #{tpu_custom_call.1} parent=1 // pred_fallthru
      _
    // Predicated region
    $region18: #{tpu_custom_call.1} parent=1 // pred_check
      _
    $region19: #{tpu_custom_call.1} parent=1 // pred_check_branch
      %30 = sbr.rel (0) target = $region21
    $region20: #{tpu_custom_call.1} parent=1 // pred_region
      _
    $region21: #{tpu_custom_call.1} parent=1 // pred_fallthru
      _
    // Predicated region
    $region22: #{tpu_custom_call.1} parent=1 // pred_check
      _
    $region23: #{tpu_custom_call.1} parent=1 // pred_check_branch
      %32 = sbr.rel (0) target = $region25
    $region24: #{tpu_custom_call.1} parent=1 // pred_region
      %s34 = ssub.s32 512, 512
      %35 = vsyncadd [#allocation5], %s34
      %s36 = sshll.u32 [#allocation4], 4
      %s37 = int_to_ptr.vmem [resolvable:$true] %s36
      %42 = dma.hbm_to_vmem [thread:$0]  %s5, 512, %s37, [#allocation5], 128, 128, 8
    $region25: #{tpu_custom_call.1} parent=1 // pred_fallthru
      _
    // Predicated region
    $region26: #{tpu_custom_call.1} parent=1 // pred_check
      _
    $region27: #{tpu_custom_call.1} parent=1 // pred_check_branch
      %44 = sbr.rel (0) target = $region29
    $region28: #{tpu_custom_call.1} parent=1 // pred_region
      _
    $region29: #{tpu_custom_call.1} parent=1 // pred_fallthru
      _
    // Predicated region
    $region30: #{tpu_custom_call.1} parent=1 // pred_check
      _
    $region31: #{tpu_custom_call.1} parent=1 // pred_check_branch
      %46 = sbr.rel (0) target = $region33
    $region32: #{tpu_custom_call.1} parent=1 // pred_region
      _
    $region33: #{tpu_custom_call.1} parent=1 // pred_fallthru
      _
    // Predicated region
    $region34: #{tpu_custom_call.1} parent=1 // pred_check
      _
    $region35: #{tpu_custom_call.1} parent=1 // pred_check_branch
      %48 = sbr.rel (0) target = $region37
    $region36: #{tpu_custom_call.1} parent=1 // pred_region
      %s50 = ssub.s32 256, 256
      %51 = vsyncadd [#allocation8], %s50
      %s52 = sshll.u32 [#allocation7], 4
      %s53 = int_to_ptr.vmem [resolvable:$true] %s52
      %58 = dma.hbm_to_vmem [thread:$0]  %s8, 256, %s53, [#allocation8], 128, 128, 8
    $region37: #{tpu_custom_call.1} parent=1 // pred_fallthru
      _
    // Predicated region
    $region38: #{tpu_custom_call.1} parent=1 // pred_check
      _
    $region39: #{tpu_custom_call.1} parent=1 // pred_check_branch
      %60 = sbr.rel (0) target = $region41
    $region40: #{tpu_custom_call.1} parent=1 // pred_region
      %61 = dma.done [#allocation5], 512
    $region41: #{tpu_custom_call.1} parent=1 // pred_fallthru
      _
    // Predicated region
    $region42: #{tpu_custom_call.1} parent=1 // pred_check
      _
    $region43: #{tpu_custom_call.1} parent=1 // pred_check_branch
      %63 = sbr.rel (0) target = $region45
    $region44: #{tpu_custom_call.1} parent=1 // pred_region
      %64 = dma.done [#allocation8], 256
    $region45: #{tpu_custom_call.1} parent=1 // pred_fallthru
      _
    %v65 = vlaneseq
    %v66 = vand.u32 %v65, 127
    %vm67 = vcmp.ge.s32.totalorder %v66, 64
    %vm68 = vcmp.lt.s32.totalorder %v66, 96
    %vm69 = vmand %vm67, %vm68
    %v70 = vld [vmem:[%s1] sm:$0xff]
    %v71 = vld [vmem:[%s1 + $0x8] sm:$0xff]
    %v72 = vld [vmem:[%s1 + $0x10] sm:$0xff]
    %v73 = vld [vmem:[%s1 + $0x18] sm:$0xff]
    %v74 = vld [vmem:[%s2] sm:$0xff]
    %v75 = vld [vmem:[%s2 + $0x8] sm:$0xff]
    %v76 = vld [vmem:[%s2 + $0x10] sm:$0xff]
    %v77 = vld [vmem:[%s2 + $0x18] sm:$0xff]
    %v78 = vld [vmem:[%s3] sm:$0x1]
    %v79 = vld [vmem:[%s0] sm:$0xff]
    %v80 = vld [vmem:[%s0 + $0x8] sm:$0xff]
    %v81 = vld [vmem:[%s0 + $0x10] sm:$0xff]
    %v82 = vld [vmem:[%s0 + $0x18] sm:$0xff]
    %v83 = vld [vmem:[%s0 + $0x20] sm:$0xff]
    %v84 = vld [vmem:[%s0 + $0x28] sm:$0xff]
    %v85 = vld [vmem:[%s0 + $0x30] sm:$0xff]
    %v86 = vld [vmem:[%s0 + $0x38] sm:$0xff]
    %v88 = vlaneseq
    %v89 = vshrl.u32 %v88, 7
    %v90 = vsub.s32 0, %v89
    %v91 = vrot.slane %v78, %v90
    %vm93 = vcmask 261120
    %v95 = vsel %vm93, %v79, 0
    %v98 = vsel %vm93, %v80, 0
    %v101 = vsel %vm93, %v81, 0
    %v104 = vsel %vm93, %v82, 0
    %v107 = vsel %vm93, %v83, 0
    %v110 = vsel %vm93, %v84, 0
    %v113 = vsel %vm93, %v85, 0
    %v116 = vsel %vm93, %v86, 0
    %118 = vmatprep.subr.mxu0 0.0
    %119 = vmatpush1.msra.mxu0 %v70
    %120 = vmatprep.subr.mxu0 0.0
    %121 = vmatpush1.msra.mxu0 %v71
    %122 = vmatprep.subr.mxu0 0.0
    %123 = vmatpush1.msra.mxu0 %v72
    %124 = vmatprep.subr.mxu0 0.0
    %125 = vmatpush1.msra.mxu0 %v73
    %126 = vmatprep.subr.mxu0 0.0
    %127 = vmatpush1.msra.mxu0 0.0
    %128 = vmatprep.subr.mxu0 0.0
    %129 = vmatpush1.msra.mxu0 0.0
    %130 = vmatprep.subr.mxu0 0.0
    %131 = vmatpush1.msra.mxu0 0.0
    %132 = vmatprep.subr.mxu0 0.0
    %133 = vmatpush1.msra.mxu0 0.0
    %134 = vmatprep.subr.mxu0 0.0
    %135 = vmatpush1.msra.mxu0 0.0
    %136 = vmatprep.subr.mxu0 0.0
    %137 = vmatpush1.msra.mxu0 0.0
    %138 = vmatprep.subr.mxu0 0.0
    %139 = vmatpush1.msra.mxu0 0.0
    %140 = vmatprep.subr.mxu0 0.0
    %141 = vmatpush1.msra.mxu0 0.0
    %142 = vmatprep.subr.mxu0 0.0
    %143 = vmatpush1.msra.mxu0 0.0
    %144 = vmatprep.subr.mxu0 0.0
    %145 = vmatpush1.msra.mxu0 0.0
    %146 = vmatprep.subr.mxu0 0.0
    %147 = vmatpush1.msra.mxu0 0.0
    %148 = vmatprep.subr.mxu0 0.0
    %149 = vmatpush1.msra.mxu0 0.0
    %150 = vmatprep.subr.mxu0 0.0
    %151 = vmatpush1.msra.mxu0 0.0
    %152 = vmatprep.subr.mxu0 0.0
    %153 = vmatpush1.msra.mxu0 0.0
    %154 = vmatprep.subr.mxu0 0.0
    %155 = vmatpush1.msra.mxu0 0.0
    %156 = vmatprep.subr.mxu0 0.0
    %157 = vmatpush1.msra.mxu0 0.0
    %158 = vmatprep.subr.mxu0 0.0
    %159 = vmatpush1.msra.mxu0 0.0
    %160 = vmatprep.subr.mxu0 0.0
    %161 = vmatpush1.msra.mxu0 0.0
    %162 = vmatprep.subr.mxu0 0.0
    %163 = vmatpush1.msra.mxu0 0.0
    %164 = vmatprep.subr.mxu0 0.0
    %165 = vmatpush1.msra.mxu0 0.0
    %166 = vmatprep.subr.mxu0 0.0
    %167 = vmatpush1.msra.mxu0 0.0
    %168 = vmatprep.subr.mxu0 0.0
    %169 = vmatpush1.msra.mxu0 0.0
    %170 = vmatprep.subr.mxu0 0.0
    %171 = vmatpush1.msra.mxu0 0.0
    %172 = vmatprep.subr.mxu0 0.0
    %173 = vmatpush1.msra.mxu0 0.0
    %174 = vmatprep.subr.mxu0 0.0
    %175 = vmatpush1.msra.mxu0 0.0
    %176 = vmatprep.subr.mxu0 0.0
    %177 = vmatpush1.msra.mxu0 0.0
    %178 = vmatprep.subr.mxu0 0.0
    %179 = vmatpush1.msra.mxu0 0.0
    %180 = vmatprep.subr.mxu0 0.0
    %181 = vmatpush1.msra.mxu0 0.0
    %182 = vmatprep.mubr.f32.mxu0 0.0
    %183 = vmatmul.mubr.f32.gmra.mrb[0].mxu0 %v95
    %v184 = vpop.f32.mrb[0].mxu0
    %v185 = vadd.f32 %v91, %v184
    %v186 = vpop.f32.mrb[0].mxu0
    %187 = vmatprep.mubr.f32.mxu0 0.0
    %188 = vmatmul.mubr.f32.gmra.mrb[0].mxu0 %v98
    %v189 = vpop.f32.mrb[0].mxu0
    %v190 = vadd.f32 %v91, %v189
    %v191 = vpop.f32.mrb[0].mxu0
    %192 = vmatprep.mubr.f32.mxu0 0.0
    %193 = vmatmul.mubr.f32.gmra.mrb[0].mxu0 %v101
    %v194 = vpop.f32.mrb[0].mxu0
    %v195 = vadd.f32 %v91, %v194
    %v196 = vpop.f32.mrb[0].mxu0
    %197 = vmatprep.mubr.f32.mxu0 0.0
    %198 = vmatmul.mubr.f32.gmra.mrb[0].mxu0 %v104
    %v199 = vpop.f32.mrb[0].mxu0
    %v200 = vadd.f32 %v91, %v199
    %v201 = vpop.f32.mrb[0].mxu0
    %202 = vmatprep.mubr.f32.mxu0 0.0
    %203 = vmatmul.mubr.f32.gmra.mrb[0].mxu0 %v107
    %v204 = vpop.f32.mrb[0].mxu0
    %v205 = vadd.f32 %v91, %v204
    %v206 = vpop.f32.mrb[0].mxu0
    %207 = vmatprep.mubr.f32.mxu0 0.0
    %208 = vmatmul.mubr.f32.gmra.mrb[0].mxu0 %v110
    %v209 = vpop.f32.mrb[0].mxu0
    %v210 = vadd.f32 %v91, %v209
    %v211 = vpop.f32.mrb[0].mxu0
    %212 = vmatprep.mubr.f32.mxu0 0.0
    %213 = vmatmul.mubr.f32.gmra.mrb[0].mxu0 %v113
    %v214 = vpop.f32.mrb[0].mxu0
    %v215 = vadd.f32 %v91, %v214
    %v216 = vpop.f32.mrb[0].mxu0
    %217 = vmatprep.mubr.f32.mxu0 0.0
    %218 = vmatmul.mubr.f32.gmra.mrb[0].mxu0 %v116
    %v219 = vpop.f32.mrb[0].mxu0
    %v220 = vadd.f32 %v91, %v219
    %v221 = vpop.f32.mrb[0].mxu0
    %222 = vdwg.mxu0
    %223 = vst [vmem:[#allocation2] sm:$0xff] %v185
    %224 = vst [vmem:[#allocation2 + $0x8] sm:$0xff] %v190
    %225 = vst [vmem:[#allocation2 + $0x10] sm:$0xff] %v195
    %226 = vst [vmem:[#allocation2 + $0x18] sm:$0xff] %v200
    %227 = vst [vmem:[#allocation2 + $0x20] sm:$0xff] %v205
    %228 = vst [vmem:[#allocation2 + $0x28] sm:$0xff] %v210
    %229 = vst [vmem:[#allocation2 + $0x30] sm:$0xff] %v215
    %230 = vst [vmem:[#allocation2 + $0x38] sm:$0xff] %v220
    %v231 = vld [vmem:[%s7] sm:$0xff]
    %v232 = vld [vmem:[#allocation7] sm:$0xff]
    %v233 = vld [vmem:[#allocation2] sm:$0xff]
    %v235 = vsel %vm93, %v231, 0
    %237 = vmatprep.subr.mxu0 0.0
    %238 = vmatpush1.msra.mxu0 %v74
    %239 = vmatprep.subr.mxu0 0.0
    %240 = vmatpush1.msra.mxu0 %v75
    %241 = vmatprep.subr.mxu0 0.0
    %242 = vmatpush1.msra.mxu0 %v76
    %243 = vmatprep.subr.mxu0 0.0
    %244 = vmatpush1.msra.mxu0 %v77
    %245 = vmatprep.subr.mxu0 0.0
    %246 = vmatpush1.msra.mxu0 0.0
    %247 = vmatprep.subr.mxu0 0.0
    %248 = vmatpush1.msra.mxu0 0.0
    %249 = vmatprep.subr.mxu0 0.0
    %250 = vmatpush1.msra.mxu0 0.0
    %251 = vmatprep.subr.mxu0 0.0
    %252 = vmatpush1.msra.mxu0 0.0
    %253 = vmatprep.subr.mxu0 0.0
    %254 = vmatpush1.msra.mxu0 0.0
    %255 = vmatprep.subr.mxu0 0.0
    %256 = vmatpush1.msra.mxu0 0.0
    %257 = vmatprep.subr.mxu0 0.0
    %258 = vmatpush1.msra.mxu0 0.0
    %259 = vmatprep.subr.mxu0 0.0
    %260 = vmatpush1.msra.mxu0 0.0
    %261 = vmatprep.subr.mxu0 0.0
    %262 = vmatpush1.msra.mxu0 0.0
    %263 = vmatprep.subr.mxu0 0.0
    %264 = vmatpush1.msra.mxu0 0.0
    %265 = vmatprep.subr.mxu0 0.0
    %266 = vmatpush1.msra.mxu0 0.0
    %267 = vmatprep.subr.mxu0 0.0
    %268 = vmatpush1.msra.mxu0 0.0
    %269 = vmatprep.subr.mxu0 0.0
    %270 = vmatpush1.msra.mxu0 0.0
    %271 = vmatprep.subr.mxu0 0.0
    %272 = vmatpush1.msra.mxu0 0.0
    %273 = vmatprep.subr.mxu0 0.0
    %274 = vmatpush1.msra.mxu0 0.0
    %275 = vmatprep.subr.mxu0 0.0
    %276 = vmatpush1.msra.mxu0 0.0
    %277 = vmatprep.subr.mxu0 0.0
    %278 = vmatpush1.msra.mxu0 0.0
    %279 = vmatprep.subr.mxu0 0.0
    %280 = vmatpush1.msra.mxu0 0.0
    %281 = vmatprep.subr.mxu0 0.0
    %282 = vmatpush1.msra.mxu0 0.0
    %283 = vmatprep.subr.mxu0 0.0
    %284 = vmatpush1.msra.mxu0 0.0
    %285 = vmatprep.subr.mxu0 0.0
    %286 = vmatpush1.msra.mxu0 0.0
    %287 = vmatprep.subr.mxu0 0.0
    %288 = vmatpush1.msra.mxu0 0.0
    %289 = vmatprep.subr.mxu0 0.0
    %290 = vmatpush1.msra.mxu0 0.0
    %291 = vmatprep.subr.mxu0 0.0
    %292 = vmatpush1.msra.mxu0 0.0
    %293 = vmatprep.subr.mxu0 0.0
    %294 = vmatpush1.msra.mxu0 0.0
    %295 = vmatprep.subr.mxu0 0.0
    %296 = vmatpush1.msra.mxu0 0.0
    %297 = vmatprep.subr.mxu0 0.0
    %298 = vmatpush1.msra.mxu0 0.0
    %299 = vmatprep.subr.mxu0 0.0
    %300 = vmatpush1.msra.mxu0 0.0
    %301 = vmatprep.mubr.f32.mxu0 0.0
    %302 = vmatmul.mubr.f32.gmra.mrb[0].mxu0 %v235
    %v303 = vpop.f32.mrb[0].mxu0
    %v304 = vadd.f32 0.0, %v303
    %v305 = vpop.f32.mrb[0].mxu0
    %306 = vdwg.mxu0
    %v307 = vadd.f32 %v233, %v304
    %v308 = vtanh.pop %v307
    %v309 = vxor.u32 %v307, 2147483648
    %v310 = vmul.f32 %v309, 1.442695
    %v311 = vpow.pop %v310
    %v312 = vadd.f32 %v311, 1.0
    %v313 = vrcp.pop %v312
    %v314 = vmul.f32 1.0, %v313
    %v315 = vsel %vm69, %v308, %v314
    %317 = vrot.lane.b32.xlu0 %v232, 32
    %v318 = vpop.permute.xlu0 %317
    %v320 = vmul.f32 %v315, %v318
    %322 = vrot.lane.b32.xlu0 %v315, 64
    %v323 = vpop.permute.xlu0 %322
    %v325 = vmul.f32 %v315, %v323
    %327 = vrot.lane.b32.xlu0 %v325, 32
    %v328 = vpop.permute.xlu0 %327
    %v330 = vadd.f32 %v320, %v328
    %v331 = vtanh.pop %v330
    %333 = vrot.lane.b32.xlu0 %v331, 64
    %v334 = vpop.permute.xlu0 %333
    %v336 = vmul.f32 %v315, %v334
    %338 = vrot.lane.b32.xlu0 %v336, 32
    %v339 = vpop.permute.xlu0 %338
    %341 = vst.msk [vmem:[#allocation3] sm:$0xff] %vm93, %v339
    %s342 = scalar_lea.vmem [#allocation2], 8
    %v343 = vld [vmem:[%s342] sm:$0xff]
    %v344 = vsel %vm93, %v339, 0
    %346 = vmatprep.subr.mxu0 0.0
    %347 = vmatpush1.msra.mxu0 %v74
    %348 = vmatprep.subr.mxu0 0.0
    %349 = vmatpush1.msra.mxu0 %v75
    %350 = vmatprep.subr.mxu0 0.0
    %351 = vmatpush1.msra.mxu0 %v76
    %352 = vmatprep.subr.mxu0 0.0
    %353 = vmatpush1.msra.mxu0 %v77
    %354 = vmatprep.subr.mxu0 0.0
    %355 = vmatpush1.msra.mxu0 0.0
    %356 = vmatprep.subr.mxu0 0.0
    %357 = vmatpush1.msra.mxu0 0.0
    %358 = vmatprep.subr.mxu0 0.0
    %359 = vmatpush1.msra.mxu0 0.0
    %360 = vmatprep.subr.mxu0 0.0
    %361 = vmatpush1.msra.mxu0 0.0
    %362 = vmatprep.subr.mxu0 0.0
    %363 = vmatpush1.msra.mxu0 0.0
    %364 = vmatprep.subr.mxu0 0.0
    %365 = vmatpush1.msra.mxu0 0.0
    %366 = vmatprep.subr.mxu0 0.0
    %367 = vmatpush1.msra.mxu0 0.0
    %368 = vmatprep.subr.mxu0 0.0
    %369 = vmatpush1.msra.mxu0 0.0
    %370 = vmatprep.subr.mxu0 0.0
    %371 = vmatpush1.msra.mxu0 0.0
    %372 = vmatprep.subr.mxu0 0.0
    %373 = vmatpush1.msra.mxu0 0.0
    %374 = vmatprep.subr.mxu0 0.0
    %375 = vmatpush1.msra.mxu0 0.0
    %376 = vmatprep.subr.mxu0 0.0
    %377 = vmatpush1.msra.mxu0 0.0
    %378 = vmatprep.subr.mxu0 0.0
    %379 = vmatpush1.msra.mxu0 0.0
    %380 = vmatprep.subr.mxu0 0.0
    %381 = vmatpush1.msra.mxu0 0.0
    %382 = vmatprep.subr.mxu0 0.0
    %383 = vmatpush1.msra.mxu0 0.0
    %384 = vmatprep.subr.mxu0 0.0
    %385 = vmatpush1.msra.mxu0 0.0
    %386 = vmatprep.subr.mxu0 0.0
    %387 = vmatpush1.msra.mxu0 0.0
    %388 = vmatprep.subr.mxu0 0.0
    %389 = vmatpush1.msra.mxu0 0.0
    %390 = vmatprep.subr.mxu0 0.0
    %391 = vmatpush1.msra.mxu0 0.0
    %392 = vmatprep.subr.mxu0 0.0
    %393 = vmatpush1.msra.mxu0 0.0
    %394 = vmatprep.subr.mxu0 0.0
    %395 = vmatpush1.msra.mxu0 0.0
    %396 = vmatprep.subr.mxu0 0.0
    %397 = vmatpush1.msra.mxu0 0.0
    %398 = vmatprep.subr.mxu0 0.0
    %399 = vmatpush1.msra.mxu0 0.0
    %400 = vmatprep.subr.mxu0 0.0
    %401 = vmatpush1.msra.mxu0 0.0
    %402 = vmatprep.subr.mxu0 0.0
    %403 = vmatpush1.msra.mxu0 0.0
    %404 = vmatprep.subr.mxu0 0.0
    %405 = vmatpush1.msra.mxu0 0.0
    %406 = vmatprep.subr.mxu0 0.0
    %407 = vmatpush1.msra.mxu0 0.0
    %408 = vmatprep.subr.mxu0 0.0
    %409 = vmatpush1.msra.mxu0 0.0
    %410 = vmatprep.mubr.f32.mxu0 0.0
    %411 = vmatmul.mubr.f32.gmra.mrb[0].mxu0 %v344
    %v412 = vpop.f32.mrb[0].mxu0
    %v413 = vadd.f32 0.0, %v412
    %v414 = vpop.f32.mrb[0].mxu0
    %415 = vdwg.mxu0
    %v416 = vadd.f32 %v343, %v413
    %v417 = vtanh.pop %v416
    %v418 = vxor.u32 %v416, 2147483648
    %v419 = vmul.f32 %v418, 1.442695
    %v420 = vpow.pop %v419
    %v421 = vadd.f32 %v420, 1.0
    %v422 = vrcp.pop %v421
    %v423 = vmul.f32 1.0, %v422
    %v424 = vsel %vm69, %v417, %v423
    %v425 = vmul.f32 %v424, %v330
    %427 = vrot.lane.b32.xlu0 %v424, 64
    %v428 = vpop.permute.xlu0 %427
    %v430 = vmul.f32 %v424, %v428
    %432 = vrot.lane.b32.xlu0 %v430, 32
    %v433 = vpop.permute.xlu0 %432
    %v435 = vadd.f32 %v425, %v433
    %v436 = vtanh.pop %v435
    %438 = vrot.lane.b32.xlu0 %v436, 64
    %v439 = vpop.permute.xlu0 %438
    %v441 = vmul.f32 %v424, %v439
    %443 = vrot.lane.b32.xlu0 %v441, 32
    %v444 = vpop.permute.xlu0 %443
    %s446 = scalar_lea.vmem [#allocation3], 8
    %447 = vst.msk [vmem:[%s446] sm:$0xff] %vm93, %v444
    %s448 = scalar_lea.vmem [#allocation2], 16
    %v449 = vld [vmem:[%s448] sm:$0xff]
    %v450 = vsel %vm93, %v444, 0
    %452 = vmatprep.subr.mxu0 0.0
    %453 = vmatpush1.msra.mxu0 %v74
    %454 = vmatprep.subr.mxu0 0.0
    %455 = vmatpush1.msra.mxu0 %v75
    %456 = vmatprep.subr.mxu0 0.0
    %457 = vmatpush1.msra.mxu0 %v76
    %458 = vmatprep.subr.mxu0 0.0
    %459 = vmatpush1.msra.mxu0 %v77
    %460 = vmatprep.subr.mxu0 0.0
    %461 = vmatpush1.msra.mxu0 0.0
    %462 = vmatprep.subr.mxu0 0.0
    %463 = vmatpush1.msra.mxu0 0.0
    %464 = vmatprep.subr.mxu0 0.0
    %465 = vmatpush1.msra.mxu0 0.0
    %466 = vmatprep.subr.mxu0 0.0
    %467 = vmatpush1.msra.mxu0 0.0
    %468 = vmatprep.subr.mxu0 0.0
    %469 = vmatpush1.msra.mxu0 0.0
    %470 = vmatprep.subr.mxu0 0.0
    %471 = vmatpush1.msra.mxu0 0.0
    %472 = vmatprep.subr.mxu0 0.0
    %473 = vmatpush1.msra.mxu0 0.0
    %474 = vmatprep.subr.mxu0 0.0
    %475 = vmatpush1.msra.mxu0 0.0
    %476 = vmatprep.subr.mxu0 0.0
    %477 = vmatpush1.msra.mxu0 0.0
    %478 = vmatprep.subr.mxu0 0.0
    %479 = vmatpush1.msra.mxu0 0.0
    %480 = vmatprep.subr.mxu0 0.0
    %481 = vmatpush1.msra.mxu0 0.0
    %482 = vmatprep.subr.mxu0 0.0
    %483 = vmatpush1.msra.mxu0 0.0
    %484 = vmatprep.subr.mxu0 0.0
    %485 = vmatpush1.msra.mxu0 0.0
    %486 = vmatprep.subr.mxu0 0.0
    %487 = vmatpush1.msra.mxu0 0.0
    %488 = vmatprep.subr.mxu0 0.0
    %489 = vmatpush1.msra.mxu0 0.0
    %490 = vmatprep.subr.mxu0 0.0
    %491 = vmatpush1.msra.mxu0 0.0
    %492 = vmatprep.subr.mxu0 0.0
    %493 = vmatpush1.msra.mxu0 0.0
    %494 = vmatprep.subr.mxu0 0.0
    %495 = vmatpush1.msra.mxu0 0.0
    %496 = vmatprep.subr.mxu0 0.0
    %497 = vmatpush1.msra.mxu0 0.0
    %498 = vmatprep.subr.mxu0 0.0
    %499 = vmatpush1.msra.mxu0 0.0
    %500 = vmatprep.subr.mxu0 0.0
    %501 = vmatpush1.msra.mxu0 0.0
    %502 = vmatprep.subr.mxu0 0.0
    %503 = vmatpush1.msra.mxu0 0.0
    %504 = vmatprep.subr.mxu0 0.0
    %505 = vmatpush1.msra.mxu0 0.0
    %506 = vmatprep.subr.mxu0 0.0
    %507 = vmatpush1.msra.mxu0 0.0
    %508 = vmatprep.subr.mxu0 0.0
    %509 = vmatpush1.msra.mxu0 0.0
    %510 = vmatprep.subr.mxu0 0.0
    %511 = vmatpush1.msra.mxu0 0.0
    %512 = vmatprep.subr.mxu0 0.0
    %513 = vmatpush1.msra.mxu0 0.0
    %514 = vmatprep.subr.mxu0 0.0
    %515 = vmatpush1.msra.mxu0 0.0
    %516 = vmatprep.mubr.f32.mxu0 0.0
    %517 = vmatmul.mubr.f32.gmra.mrb[0].mxu0 %v450
    %v518 = vpop.f32.mrb[0].mxu0
    %v519 = vadd.f32 0.0, %v518
    %v520 = vpop.f32.mrb[0].mxu0
    %521 = vdwg.mxu0
    %v522 = vadd.f32 %v449, %v519
    %v523 = vtanh.pop %v522
    %v524 = vxor.u32 %v522, 2147483648
    %v525 = vmul.f32 %v524, 1.442695
    %v526 = vpow.pop %v525
    %v527 = vadd.f32 %v526, 1.0
    %v528 = vrcp.pop %v527
    %v529 = vmul.f32 1.0, %v528
    %v530 = vsel %vm69, %v523, %v529
    %v531 = vmul.f32 %v530, %v435
    %533 = vrot.lane.b32.xlu0 %v530, 64
    %v534 = vpop.permute.xlu0 %533
    %v536 = vmul.f32 %v530, %v534
    %538 = vrot.lane.b32.xlu0 %v536, 32
    %v539 = vpop.permute.xlu0 %538
    %v541 = vadd.f32 %v531, %v539
    %v542 = vtanh.pop %v541
    %544 = vrot.lane.b32.xlu0 %v542, 64
    %v545 = vpop.permute.xlu0 %544
    %v547 = vmul.f32 %v530, %v545
    %549 = vrot.lane.b32.xlu0 %v547, 32
    %v550 = vpop.permute.xlu0 %549
    %s552 = scalar_lea.vmem [#allocation3], 16
    %553 = vst.msk [vmem:[%s552] sm:$0xff] %vm93, %v550
    %s554 = scalar_lea.vmem [#allocation2], 24
    %v555 = vld [vmem:[%s554] sm:$0xff]
    %v556 = vsel %vm93, %v550, 0
    %558 = vmatprep.subr.mxu0 0.0
    %559 = vmatpush1.msra.mxu0 %v74
    %560 = vmatprep.subr.mxu0 0.0
    %561 = vmatpush1.msra.mxu0 %v75
    %562 = vmatprep.subr.mxu0 0.0
    %563 = vmatpush1.msra.mxu0 %v76
    %564 = vmatprep.subr.mxu0 0.0
    %565 = vmatpush1.msra.mxu0 %v77
    %566 = vmatprep.subr.mxu0 0.0
    %567 = vmatpush1.msra.mxu0 0.0
    %568 = vmatprep.subr.mxu0 0.0
    %569 = vmatpush1.msra.mxu0 0.0
    %570 = vmatprep.subr.mxu0 0.0
    %571 = vmatpush1.msra.mxu0 0.0
    %572 = vmatprep.subr.mxu0 0.0
    %573 = vmatpush1.msra.mxu0 0.0
    %574 = vmatprep.subr.mxu0 0.0
    %575 = vmatpush1.msra.mxu0 0.0
    %576 = vmatprep.subr.mxu0 0.0
    %577 = vmatpush1.msra.mxu0 0.0
    %578 = vmatprep.subr.mxu0 0.0
    %579 = vmatpush1.msra.mxu0 0.0
    %580 = vmatprep.subr.mxu0 0.0
    %581 = vmatpush1.msra.mxu0 0.0
    %582 = vmatprep.subr.mxu0 0.0
    %583 = vmatpush1.msra.mxu0 0.0
    %584 = vmatprep.subr.mxu0 0.0
    %585 = vmatpush1.msra.mxu0 0.0
    %586 = vmatprep.subr.mxu0 0.0
    %587 = vmatpush1.msra.mxu0 0.0
    %588 = vmatprep.subr.mxu0 0.0
    %589 = vmatpush1.msra.mxu0 0.0
    %590 = vmatprep.subr.mxu0 0.0
    %591 = vmatpush1.msra.mxu0 0.0
    %592 = vmatprep.subr.mxu0 0.0
    %593 = vmatpush1.msra.mxu0 0.0
    %594 = vmatprep.subr.mxu0 0.0
    %595 = vmatpush1.msra.mxu0 0.0
    %596 = vmatprep.subr.mxu0 0.0
    %597 = vmatpush1.msra.mxu0 0.0
    %598 = vmatprep.subr.mxu0 0.0
    %599 = vmatpush1.msra.mxu0 0.0
    %600 = vmatprep.subr.mxu0 0.0
    %601 = vmatpush1.msra.mxu0 0.0
    %602 = vmatprep.subr.mxu0 0.0
    %603 = vmatpush1.msra.mxu0 0.0
    %604 = vmatprep.subr.mxu0 0.0
    %605 = vmatpush1.msra.mxu0 0.0
    %606 = vmatprep.subr.mxu0 0.0
    %607 = vmatpush1.msra.mxu0 0.0
    %608 = vmatprep.subr.mxu0 0.0
    %609 = vmatpush1.msra.mxu0 0.0
    %610 = vmatprep.subr.mxu0 0.0
    %611 = vmatpush1.msra.mxu0 0.0
    %612 = vmatprep.subr.mxu0 0.0
    %613 = vmatpush1.msra.mxu0 0.0
    %614 = vmatprep.subr.mxu0 0.0
    %615 = vmatpush1.msra.mxu0 0.0
    %616 = vmatprep.subr.mxu0 0.0
    %617 = vmatpush1.msra.mxu0 0.0
    %618 = vmatprep.subr.mxu0 0.0
    %619 = vmatpush1.msra.mxu0 0.0
    %620 = vmatprep.subr.mxu0 0.0
    %621 = vmatpush1.msra.mxu0 0.0
    %622 = vmatprep.mubr.f32.mxu0 0.0
    %623 = vmatmul.mubr.f32.gmra.mrb[0].mxu0 %v556
    %v624 = vpop.f32.mrb[0].mxu0
    %v625 = vadd.f32 0.0, %v624
    %v626 = vpop.f32.mrb[0].mxu0
    %627 = vdwg.mxu0
    %v628 = vadd.f32 %v555, %v625
    %v629 = vtanh.pop %v628
    %v630 = vxor.u32 %v628, 2147483648
    %v631 = vmul.f32 %v630, 1.442695
    %v632 = vpow.pop %v631
    %v633 = vadd.f32 %v632, 1.0
    %v634 = vrcp.pop %v633
    %v635 = vmul.f32 1.0, %v634
    %v636 = vsel %vm69, %v629, %v635
    %v637 = vmul.f32 %v636, %v541
    %639 = vrot.lane.b32.xlu0 %v636, 64
    %v640 = vpop.permute.xlu0 %639
    %v642 = vmul.f32 %v636, %v640
    %644 = vrot.lane.b32.xlu0 %v642, 32
    %v645 = vpop.permute.xlu0 %644
    %v647 = vadd.f32 %v637, %v645
    %v648 = vtanh.pop %v647
    %650 = vrot.lane.b32.xlu0 %v648, 64
    %v651 = vpop.permute.xlu0 %650
    %v653 = vmul.f32 %v636, %v651
    %655 = vrot.lane.b32.xlu0 %v653, 32
    %v656 = vpop.permute.xlu0 %655
    %s658 = scalar_lea.vmem [#allocation3], 24
    %659 = vst.msk [vmem:[%s658] sm:$0xff] %vm93, %v656
    %s660 = scalar_lea.vmem [#allocation2], 32
    %v661 = vld [vmem:[%s660] sm:$0xff]
    %v662 = vsel %vm93, %v656, 0
    %664 = vmatprep.subr.mxu0 0.0
    %665 = vmatpush1.msra.mxu0 %v74
    %666 = vmatprep.subr.mxu0 0.0
    %667 = vmatpush1.msra.mxu0 %v75
    %668 = vmatprep.subr.mxu0 0.0
    %669 = vmatpush1.msra.mxu0 %v76
    %670 = vmatprep.subr.mxu0 0.0
    %671 = vmatpush1.msra.mxu0 %v77
    %672 = vmatprep.subr.mxu0 0.0
    %673 = vmatpush1.msra.mxu0 0.0
    %674 = vmatprep.subr.mxu0 0.0
    %675 = vmatpush1.msra.mxu0 0.0
    %676 = vmatprep.subr.mxu0 0.0
    %677 = vmatpush1.msra.mxu0 0.0
    %678 = vmatprep.subr.mxu0 0.0
    %679 = vmatpush1.msra.mxu0 0.0
    %680 = vmatprep.subr.mxu0 0.0
    %681 = vmatpush1.msra.mxu0 0.0
    %682 = vmatprep.subr.mxu0 0.0
    %683 = vmatpush1.msra.mxu0 0.0
    %684 = vmatprep.subr.mxu0 0.0
    %685 = vmatpush1.msra.mxu0 0.0
    %686 = vmatprep.subr.mxu0 0.0
    %687 = vmatpush1.msra.mxu0 0.0
    %688 = vmatprep.subr.mxu0 0.0
    %689 = vmatpush1.msra.mxu0 0.0
    %690 = vmatprep.subr.mxu0 0.0
    %691 = vmatpush1.msra.mxu0 0.0
    %692 = vmatprep.subr.mxu0 0.0
    %693 = vmatpush1.msra.mxu0 0.0
    %694 = vmatprep.subr.mxu0 0.0
    %695 = vmatpush1.msra.mxu0 0.0
    %696 = vmatprep.subr.mxu0 0.0
    %697 = vmatpush1.msra.mxu0 0.0
    %698 = vmatprep.subr.mxu0 0.0
    %699 = vmatpush1.msra.mxu0 0.0
    %700 = vmatprep.subr.mxu0 0.0
    %701 = vmatpush1.msra.mxu0 0.0
    %702 = vmatprep.subr.mxu0 0.0
    %703 = vmatpush1.msra.mxu0 0.0
    %704 = vmatprep.subr.mxu0 0.0
    %705 = vmatpush1.msra.mxu0 0.0
    %706 = vmatprep.subr.mxu0 0.0
    %707 = vmatpush1.msra.mxu0 0.0
    %708 = vmatprep.subr.mxu0 0.0
    %709 = vmatpush1.msra.mxu0 0.0
    %710 = vmatprep.subr.mxu0 0.0
    %711 = vmatpush1.msra.mxu0 0.0
    %712 = vmatprep.subr.mxu0 0.0
    %713 = vmatpush1.msra.mxu0 0.0
    %714 = vmatprep.subr.mxu0 0.0
    %715 = vmatpush1.msra.mxu0 0.0
    %716 = vmatprep.subr.mxu0 0.0
    %717 = vmatpush1.msra.mxu0 0.0
    %718 = vmatprep.subr.mxu0 0.0
    %719 = vmatpush1.msra.mxu0 0.0
    %720 = vmatprep.subr.mxu0 0.0
    %721 = vmatpush1.msra.mxu0 0.0
    %722 = vmatprep.subr.mxu0 0.0
    %723 = vmatpush1.msra.mxu0 0.0
    %724 = vmatprep.subr.mxu0 0.0
    %725 = vmatpush1.msra.mxu0 0.0
    %726 = vmatprep.subr.mxu0 0.0
    %727 = vmatpush1.msra.mxu0 0.0
    %728 = vmatprep.mubr.f32.mxu0 0.0
    %729 = vmatmul.mubr.f32.gmra.mrb[0].mxu0 %v662
    %v730 = vpop.f32.mrb[0].mxu0
    %v731 = vadd.f32 0.0, %v730
    %v732 = vpop.f32.mrb[0].mxu0
    %733 = vdwg.mxu0
    %v734 = vadd.f32 %v661, %v731
    %v735 = vtanh.pop %v734
    %v736 = vxor.u32 %v734, 2147483648
    %v737 = vmul.f32 %v736, 1.442695
    %v738 = vpow.pop %v737
    %v739 = vadd.f32 %v738, 1.0
    %v740 = vrcp.pop %v739
    %v741 = vmul.f32 1.0, %v740
    %v742 = vsel %vm69, %v735, %v741
    %v743 = vmul.f32 %v742, %v647
    %745 = vrot.lane.b32.xlu0 %v742, 64
    %v746 = vpop.permute.xlu0 %745
    %v748 = vmul.f32 %v742, %v746
    %750 = vrot.lane.b32.xlu0 %v748, 32
    %v751 = vpop.permute.xlu0 %750
    %v753 = vadd.f32 %v743, %v751
    %v754 = vtanh.pop %v753
    %756 = vrot.lane.b32.xlu0 %v754, 64
    %v757 = vpop.permute.xlu0 %756
    %v759 = vmul.f32 %v742, %v757
    %761 = vrot.lane.b32.xlu0 %v759, 32
    %v762 = vpop.permute.xlu0 %761
    %s764 = scalar_lea.vmem [#allocation3], 32
    %765 = vst.msk [vmem:[%s764] sm:$0xff] %vm93, %v762
    %s766 = scalar_lea.vmem [#allocation2], 40
    %v767 = vld [vmem:[%s766] sm:$0xff]
    %v768 = vsel %vm93, %v762, 0
    %770 = vmatprep.subr.mxu0 0.0
    %771 = vmatpush1.msra.mxu0 %v74
    %772 = vmatprep.subr.mxu0 0.0
    %773 = vmatpush1.msra.mxu0 %v75
    %774 = vmatprep.subr.mxu0 0.0
    %775 = vmatpush1.msra.mxu0 %v76
    %776 = vmatprep.subr.mxu0 0.0
    %777 = vmatpush1.msra.mxu0 %v77
    %778 = vmatprep.subr.mxu0 0.0
    %779 = vmatpush1.msra.mxu0 0.0
    %780 = vmatprep.subr.mxu0 0.0
    %781 = vmatpush1.msra.mxu0 0.0
    %782 = vmatprep.subr.mxu0 0.0
    %783 = vmatpush1.msra.mxu0 0.0
    %784 = vmatprep.subr.mxu0 0.0
    %785 = vmatpush1.msra.mxu0 0.0
    %786 = vmatprep.subr.mxu0 0.0
    %787 = vmatpush1.msra.mxu0 0.0
    %788 = vmatprep.subr.mxu0 0.0
    %789 = vmatpush1.msra.mxu0 0.0
    %790 = vmatprep.subr.mxu0 0.0
    %791 = vmatpush1.msra.mxu0 0.0
    %792 = vmatprep.subr.mxu0 0.0
    %793 = vmatpush1.msra.mxu0 0.0
    %794 = vmatprep.subr.mxu0 0.0
    %795 = vmatpush1.msra.mxu0 0.0
    %796 = vmatprep.subr.mxu0 0.0
    %797 = vmatpush1.msra.mxu0 0.0
    %798 = vmatprep.subr.mxu0 0.0
    %799 = vmatpush1.msra.mxu0 0.0
    %800 = vmatprep.subr.mxu0 0.0
    %801 = vmatpush1.msra.mxu0 0.0
    %802 = vmatprep.subr.mxu0 0.0
    %803 = vmatpush1.msra.mxu0 0.0
    %804 = vmatprep.subr.mxu0 0.0
    %805 = vmatpush1.msra.mxu0 0.0
    %806 = vmatprep.subr.mxu0 0.0
    %807 = vmatpush1.msra.mxu0 0.0
    %808 = vmatprep.subr.mxu0 0.0
    %809 = vmatpush1.msra.mxu0 0.0
    %810 = vmatprep.subr.mxu0 0.0
    %811 = vmatpush1.msra.mxu0 0.0
    %812 = vmatprep.subr.mxu0 0.0
    %813 = vmatpush1.msra.mxu0 0.0
    %814 = vmatprep.subr.mxu0 0.0
    %815 = vmatpush1.msra.mxu0 0.0
    %816 = vmatprep.subr.mxu0 0.0
    %817 = vmatpush1.msra.mxu0 0.0
    %818 = vmatprep.subr.mxu0 0.0
    %819 = vmatpush1.msra.mxu0 0.0
    %820 = vmatprep.subr.mxu0 0.0
    %821 = vmatpush1.msra.mxu0 0.0
    %822 = vmatprep.subr.mxu0 0.0
    %823 = vmatpush1.msra.mxu0 0.0
    %824 = vmatprep.subr.mxu0 0.0
    %825 = vmatpush1.msra.mxu0 0.0
    %826 = vmatprep.subr.mxu0 0.0
    %827 = vmatpush1.msra.mxu0 0.0
    %828 = vmatprep.subr.mxu0 0.0
    %829 = vmatpush1.msra.mxu0 0.0
    %830 = vmatprep.subr.mxu0 0.0
    %831 = vmatpush1.msra.mxu0 0.0
    %832 = vmatprep.subr.mxu0 0.0
    %833 = vmatpush1.msra.mxu0 0.0
    %834 = vmatprep.mubr.f32.mxu0 0.0
    %835 = vmatmul.mubr.f32.gmra.mrb[0].mxu0 %v768
    %v836 = vpop.f32.mrb[0].mxu0
    %v837 = vadd.f32 0.0, %v836
    %v838 = vpop.f32.mrb[0].mxu0
    %839 = vdwg.mxu0
    %v840 = vadd.f32 %v767, %v837
    %v841 = vtanh.pop %v840
    %v842 = vxor.u32 %v840, 2147483648
    %v843 = vmul.f32 %v842, 1.442695
    %v844 = vpow.pop %v843
    %v845 = vadd.f32 %v844, 1.0
    %v846 = vrcp.pop %v845
    %v847 = vmul.f32 1.0, %v846
    %v848 = vsel %vm69, %v841, %v847
    %v849 = vmul.f32 %v848, %v753
    %851 = vrot.lane.b32.xlu0 %v848, 64
    %v852 = vpop.permute.xlu0 %851
    %v854 = vmul.f32 %v848, %v852
    %856 = vrot.lane.b32.xlu0 %v854, 32
    %v857 = vpop.permute.xlu0 %856
    %v859 = vadd.f32 %v849, %v857
    %v860 = vtanh.pop %v859
    %862 = vrot.lane.b32.xlu0 %v860, 64
    %v863 = vpop.permute.xlu0 %862
    %v865 = vmul.f32 %v848, %v863
    %867 = vrot.lane.b32.xlu0 %v865, 32
    %v868 = vpop.permute.xlu0 %867
    %s870 = scalar_lea.vmem [#allocation3], 40
    %871 = vst.msk [vmem:[%s870] sm:$0xff] %vm93, %v868
    %s872 = scalar_lea.vmem [#allocation2], 48
    %v873 = vld [vmem:[%s872] sm:$0xff]
    %v874 = vsel %vm93, %v868, 0
    %876 = vmatprep.subr.mxu0 0.0
    %877 = vmatpush1.msra.mxu0 %v74
    %878 = vmatprep.subr.mxu0 0.0
    %879 = vmatpush1.msra.mxu0 %v75
    %880 = vmatprep.subr.mxu0 0.0
    %881 = vmatpush1.msra.mxu0 %v76
    %882 = vmatprep.subr.mxu0 0.0
    %883 = vmatpush1.msra.mxu0 %v77
    %884 = vmatprep.subr.mxu0 0.0
    %885 = vmatpush1.msra.mxu0 0.0
    %886 = vmatprep.subr.mxu0 0.0
    %887 = vmatpush1.msra.mxu0 0.0
    %888 = vmatprep.subr.mxu0 0.0
    %889 = vmatpush1.msra.mxu0 0.0
    %890 = vmatprep.subr.mxu0 0.0
    %891 = vmatpush1.msra.mxu0 0.0
    %892 = vmatprep.subr.mxu0 0.0
    %893 = vmatpush1.msra.mxu0 0.0
    %894 = vmatprep.subr.mxu0 0.0
    %895 = vmatpush1.msra.mxu0 0.0
    %896 = vmatprep.subr.mxu0 0.0
    %897 = vmatpush1.msra.mxu0 0.0
    %898 = vmatprep.subr.mxu0 0.0
    %899 = vmatpush1.msra.mxu0 0.0
    %900 = vmatprep.subr.mxu0 0.0
    %901 = vmatpush1.msra.mxu0 0.0
    %902 = vmatprep.subr.mxu0 0.0
    %903 = vmatpush1.msra.mxu0 0.0
    %904 = vmatprep.subr.mxu0 0.0
    %905 = vmatpush1.msra.mxu0 0.0
    %906 = vmatprep.subr.mxu0 0.0
    %907 = vmatpush1.msra.mxu0 0.0
    %908 = vmatprep.subr.mxu0 0.0
    %909 = vmatpush1.msra.mxu0 0.0
    %910 = vmatprep.subr.mxu0 0.0
    %911 = vmatpush1.msra.mxu0 0.0
    %912 = vmatprep.subr.mxu0 0.0
    %913 = vmatpush1.msra.mxu0 0.0
    %914 = vmatprep.subr.mxu0 0.0
    %915 = vmatpush1.msra.mxu0 0.0
    %916 = vmatprep.subr.mxu0 0.0
    %917 = vmatpush1.msra.mxu0 0.0
    %918 = vmatprep.subr.mxu0 0.0
    %919 = vmatpush1.msra.mxu0 0.0
    %920 = vmatprep.subr.mxu0 0.0
    %921 = vmatpush1.msra.mxu0 0.0
    %922 = vmatprep.subr.mxu0 0.0
    %923 = vmatpush1.msra.mxu0 0.0
    %924 = vmatprep.subr.mxu0 0.0
    %925 = vmatpush1.msra.mxu0 0.0
    %926 = vmatprep.subr.mxu0 0.0
    %927 = vmatpush1.msra.mxu0 0.0
    %928 = vmatprep.subr.mxu0 0.0
    %929 = vmatpush1.msra.mxu0 0.0
    %930 = vmatprep.subr.mxu0 0.0
    %931 = vmatpush1.msra.mxu0 0.0
    %932 = vmatprep.subr.mxu0 0.0
    %933 = vmatpush1.msra.mxu0 0.0
    %934 = vmatprep.subr.mxu0 0.0
    %935 = vmatpush1.msra.mxu0 0.0
    %936 = vmatprep.subr.mxu0 0.0
    %937 = vmatpush1.msra.mxu0 0.0
    %938 = vmatprep.subr.mxu0 0.0
    %939 = vmatpush1.msra.mxu0 0.0
    %940 = vmatprep.mubr.f32.mxu0 0.0
    %941 = vmatmul.mubr.f32.gmra.mrb[0].mxu0 %v874
    %v942 = vpop.f32.mrb[0].mxu0
    %v943 = vadd.f32 0.0, %v942
    %v944 = vpop.f32.mrb[0].mxu0
    %945 = vdwg.mxu0
    %v946 = vadd.f32 %v873, %v943
    %v947 = vtanh.pop %v946
    %v948 = vxor.u32 %v946, 2147483648
    %v949 = vmul.f32 %v948, 1.442695
    %v950 = vpow.pop %v949
    %v951 = vadd.f32 %v950, 1.0
    %v952 = vrcp.pop %v951
    %v953 = vmul.f32 1.0, %v952
    %v954 = vsel %vm69, %v947, %v953
    %v955 = vmul.f32 %v954, %v859
    %957 = vrot.lane.b32.xlu0 %v954, 64
    %v958 = vpop.permute.xlu0 %957
    %v960 = vmul.f32 %v954, %v958
    %962 = vrot.lane.b32.xlu0 %v960, 32
    %v963 = vpop.permute.xlu0 %962
    %v965 = vadd.f32 %v955, %v963
    %v966 = vtanh.pop %v965
    %968 = vrot.lane.b32.xlu0 %v966, 64
    %v969 = vpop.permute.xlu0 %968
    %v971 = vmul.f32 %v954, %v969
    %973 = vrot.lane.b32.xlu0 %v971, 32
    %v974 = vpop.permute.xlu0 %973
    %s976 = scalar_lea.vmem [#allocation3], 48
    %977 = vst.msk [vmem:[%s976] sm:$0xff] %vm93, %v974
    %s978 = scalar_lea.vmem [#allocation2], 56
    %v979 = vld [vmem:[%s978] sm:$0xff]
    %v980 = vsel %vm93, %v974, 0
    %982 = vmatprep.subr.mxu0 0.0
    %983 = vmatpush1.msra.mxu0 %v74
    %984 = vmatprep.subr.mxu0 0.0
    %985 = vmatpush1.msra.mxu0 %v75
    %986 = vmatprep.subr.mxu0 0.0
    %987 = vmatpush1.msra.mxu0 %v76
    %988 = vmatprep.subr.mxu0 0.0
    %989 = vmatpush1.msra.mxu0 %v77
    %990 = vmatprep.subr.mxu0 0.0
    %991 = vmatpush1.msra.mxu0 0.0
    %992 = vmatprep.subr.mxu0 0.0
    %993 = vmatpush1.msra.mxu0 0.0
    %994 = vmatprep.subr.mxu0 0.0
    %995 = vmatpush1.msra.mxu0 0.0
    %996 = vmatprep.subr.mxu0 0.0
    %997 = vmatpush1.msra.mxu0 0.0
    %998 = vmatprep.subr.mxu0 0.0
    %999 = vmatpush1.msra.mxu0 0.0
    %1000 = vmatprep.subr.mxu0 0.0
    %1001 = vmatpush1.msra.mxu0 0.0
    %1002 = vmatprep.subr.mxu0 0.0
    %1003 = vmatpush1.msra.mxu0 0.0
    %1004 = vmatprep.subr.mxu0 0.0
    %1005 = vmatpush1.msra.mxu0 0.0
    %1006 = vmatprep.subr.mxu0 0.0
    %1007 = vmatpush1.msra.mxu0 0.0
    %1008 = vmatprep.subr.mxu0 0.0
    %1009 = vmatpush1.msra.mxu0 0.0
    %1010 = vmatprep.subr.mxu0 0.0
    %1011 = vmatpush1.msra.mxu0 0.0
    %1012 = vmatprep.subr.mxu0 0.0
    %1013 = vmatpush1.msra.mxu0 0.0
    %1014 = vmatprep.subr.mxu0 0.0
    %1015 = vmatpush1.msra.mxu0 0.0
    %1016 = vmatprep.subr.mxu0 0.0
    %1017 = vmatpush1.msra.mxu0 0.0
    %1018 = vmatprep.subr.mxu0 0.0
    %1019 = vmatpush1.msra.mxu0 0.0
    %1020 = vmatprep.subr.mxu0 0.0
    %1021 = vmatpush1.msra.mxu0 0.0
    %1022 = vmatprep.subr.mxu0 0.0
    %1023 = vmatpush1.msra.mxu0 0.0
    %1024 = vmatprep.subr.mxu0 0.0
    %1025 = vmatpush1.msra.mxu0 0.0
    %1026 = vmatprep.subr.mxu0 0.0
    %1027 = vmatpush1.msra.mxu0 0.0
    %1028 = vmatprep.subr.mxu0 0.0
    %1029 = vmatpush1.msra.mxu0 0.0
    %1030 = vmatprep.subr.mxu0 0.0
    %1031 = vmatpush1.msra.mxu0 0.0
    %1032 = vmatprep.subr.mxu0 0.0
    %1033 = vmatpush1.msra.mxu0 0.0
    %1034 = vmatprep.subr.mxu0 0.0
    %1035 = vmatpush1.msra.mxu0 0.0
    %1036 = vmatprep.subr.mxu0 0.0
    %1037 = vmatpush1.msra.mxu0 0.0
    %1038 = vmatprep.subr.mxu0 0.0
    %1039 = vmatpush1.msra.mxu0 0.0
    %1040 = vmatprep.subr.mxu0 0.0
    %1041 = vmatpush1.msra.mxu0 0.0
    %1042 = vmatprep.subr.mxu0 0.0
    %1043 = vmatpush1.msra.mxu0 0.0
    %1044 = vmatprep.subr.mxu0 0.0
    %1045 = vmatpush1.msra.mxu0 0.0
    %1046 = vmatprep.mubr.f32.mxu0 0.0
    %1047 = vmatmul.mubr.f32.gmra.mrb[0].mxu0 %v980
    %v1048 = vpop.f32.mrb[0].mxu0
    %v1049 = vadd.f32 0.0, %v1048
    %v1050 = vpop.f32.mrb[0].mxu0
    %1051 = vdwg.mxu0
    %v1052 = vadd.f32 %v979, %v1049
    %v1053 = vtanh.pop %v1052
    %v1054 = vxor.u32 %v1052, 2147483648
    %v1055 = vmul.f32 %v1054, 1.442695
    %v1056 = vpow.pop %v1055
    %v1057 = vadd.f32 %v1056, 1.0
    %v1058 = vrcp.pop %v1057
    %v1059 = vmul.f32 1.0, %v1058
    %v1060 = vsel %vm69, %v1053, %v1059
    %v1061 = vmul.f32 %v1060, %v965
    %1063 = vrot.lane.b32.xlu0 %v1060, 64
    %v1064 = vpop.permute.xlu0 %1063
    %v1066 = vmul.f32 %v1060, %v1064
    %1068 = vrot.lane.b32.xlu0 %v1066, 32
    %v1069 = vpop.permute.xlu0 %1068
    %v1071 = vadd.f32 %v1061, %v1069
    %v1072 = vtanh.pop %v1071
    %1074 = vrot.lane.b32.xlu0 %v1072, 64
    %v1075 = vpop.permute.xlu0 %1074
    %v1077 = vmul.f32 %v1060, %v1075
    %1079 = vrot.lane.b32.xlu0 %v1077, 32
    %v1080 = vpop.permute.xlu0 %1079
    %s1082 = scalar_lea.vmem [#allocation3], 56
    %1083 = vst.msk [vmem:[%s1082] sm:$0xff] %vm93, %v1080
    %1084 = vst.msk [vmem:[#allocation9] sm:$0xff] %vm93, %v1080
    %1086 = vrot.lane.b32.xlu0 %v1071, 96
    %v1087 = vpop.permute.xlu0 %1086
    %1089 = vst.msk [vmem:[#allocation10] sm:$0xff] %vm93, %v1087
    %v1090 = vld [vmem:[%s4] sm:$0xff]
    %v1091 = vld [vmem:[%s4 + $0x8] sm:$0xff]
    %v1092 = vld [vmem:[%s4 + $0x10] sm:$0xff]
    %v1093 = vld [vmem:[%s4 + $0x18] sm:$0xff]
    %v1094 = vld [vmem:[#allocation4] sm:$0xff]
    %v1095 = vld [vmem:[#allocation4 + $0x8] sm:$0xff]
    %v1096 = vld [vmem:[#allocation4 + $0x10] sm:$0xff]
    %v1097 = vld [vmem:[#allocation4 + $0x18] sm:$0xff]
    %v1098 = vld [vmem:[%s6] sm:$0x1]
    %v1099 = vld [vmem:[#allocation3] sm:$0xff]
    %v1100 = vld [vmem:[#allocation3 + $0x8] sm:$0xff]
    %v1101 = vld [vmem:[#allocation3 + $0x10] sm:$0xff]
    %v1102 = vld [vmem:[#allocation3 + $0x18] sm:$0xff]
    %v1103 = vld [vmem:[#allocation3 + $0x20] sm:$0xff]
    %v1104 = vld [vmem:[#allocation3 + $0x28] sm:$0xff]
    %v1105 = vld [vmem:[#allocation3 + $0x30] sm:$0xff]
    %v1106 = vld [vmem:[#allocation3 + $0x38] sm:$0xff]
    %v1108 = vlaneseq
    %v1109 = vshrl.u32 %v1108, 7
    %v1110 = vsub.s32 0, %v1109
    %v1111 = vrot.slane %v1098, %v1110
    %v1114 = vsel %vm93, %v1099, 0
    %v1117 = vsel %vm93, %v1100, 0
    %v1120 = vsel %vm93, %v1101, 0
    %v1123 = vsel %vm93, %v1102, 0
    %v1126 = vsel %vm93, %v1103, 0
    %v1129 = vsel %vm93, %v1104, 0
    %v1132 = vsel %vm93, %v1105, 0
    %v1135 = vsel %vm93, %v1106, 0
    %1137 = vmatprep.subr.mxu0 0.0
    %1138 = vmatpush1.msra.mxu0 %v1090
    %1139 = vmatprep.subr.mxu0 0.0
    %1140 = vmatpush1.msra.mxu0 %v1091
    %1141 = vmatprep.subr.mxu0 0.0
    %1142 = vmatpush1.msra.mxu0 %v1092
    %1143 = vmatprep.subr.mxu0 0.0
    %1144 = vmatpush1.msra.mxu0 %v1093
    %1145 = vmatprep.subr.mxu0 0.0
    %1146 = vmatpush1.msra.mxu0 0.0
    %1147 = vmatprep.subr.mxu0 0.0
    %1148 = vmatpush1.msra.mxu0 0.0
    %1149 = vmatprep.subr.mxu0 0.0
    %1150 = vmatpush1.msra.mxu0 0.0
    %1151 = vmatprep.subr.mxu0 0.0
    %1152 = vmatpush1.msra.mxu0 0.0
    %1153 = vmatprep.subr.mxu0 0.0
    %1154 = vmatpush1.msra.mxu0 0.0
    %1155 = vmatprep.subr.mxu0 0.0
    %1156 = vmatpush1.msra.mxu0 0.0
    %1157 = vmatprep.subr.mxu0 0.0
    %1158 = vmatpush1.msra.mxu0 0.0
    %1159 = vmatprep.subr.mxu0 0.0
    %1160 = vmatpush1.msra.mxu0 0.0
    %1161 = vmatprep.subr.mxu0 0.0
    %1162 = vmatpush1.msra.mxu0 0.0
    %1163 = vmatprep.subr.mxu0 0.0
    %1164 = vmatpush1.msra.mxu0 0.0
    %1165 = vmatprep.subr.mxu0 0.0
    %1166 = vmatpush1.msra.mxu0 0.0
    %1167 = vmatprep.subr.mxu0 0.0
    %1168 = vmatpush1.msra.mxu0 0.0
    %1169 = vmatprep.subr.mxu0 0.0
    %1170 = vmatpush1.msra.mxu0 0.0
    %1171 = vmatprep.subr.mxu0 0.0
    %1172 = vmatpush1.msra.mxu0 0.0
    %1173 = vmatprep.subr.mxu0 0.0
    %1174 = vmatpush1.msra.mxu0 0.0
    %1175 = vmatprep.subr.mxu0 0.0
    %1176 = vmatpush1.msra.mxu0 0.0
    %1177 = vmatprep.subr.mxu0 0.0
    %1178 = vmatpush1.msra.mxu0 0.0
    %1179 = vmatprep.subr.mxu0 0.0
    %1180 = vmatpush1.msra.mxu0 0.0
    %1181 = vmatprep.subr.mxu0 0.0
    %1182 = vmatpush1.msra.mxu0 0.0
    %1183 = vmatprep.subr.mxu0 0.0
    %1184 = vmatpush1.msra.mxu0 0.0
    %1185 = vmatprep.subr.mxu0 0.0
    %1186 = vmatpush1.msra.mxu0 0.0
    %1187 = vmatprep.subr.mxu0 0.0
    %1188 = vmatpush1.msra.mxu0 0.0
    %1189 = vmatprep.subr.mxu0 0.0
    %1190 = vmatpush1.msra.mxu0 0.0
    %1191 = vmatprep.subr.mxu0 0.0
    %1192 = vmatpush1.msra.mxu0 0.0
    %1193 = vmatprep.subr.mxu0 0.0
    %1194 = vmatpush1.msra.mxu0 0.0
    %1195 = vmatprep.subr.mxu0 0.0
    %1196 = vmatpush1.msra.mxu0 0.0
    %1197 = vmatprep.subr.mxu0 0.0
    %1198 = vmatpush1.msra.mxu0 0.0
    %1199 = vmatprep.subr.mxu0 0.0
    %1200 = vmatpush1.msra.mxu0 0.0
    %1201 = vmatprep.mubr.f32.mxu0 0.0
    %1202 = vmatmul.mubr.f32.gmra.mrb[0].mxu0 %v1114
    %v1203 = vpop.f32.mrb[0].mxu0
    %v1204 = vadd.f32 %v1111, %v1203
    %v1205 = vpop.f32.mrb[0].mxu0
    %1206 = vmatprep.mubr.f32.mxu0 0.0
    %1207 = vmatmul.mubr.f32.gmra.mrb[0].mxu0 %v1117
    %v1208 = vpop.f32.mrb[0].mxu0
    %v1209 = vadd.f32 %v1111, %v1208
    %v1210 = vpop.f32.mrb[0].mxu0
    %1211 = vmatprep.mubr.f32.mxu0 0.0
    %1212 = vmatmul.mubr.f32.gmra.mrb[0].mxu0 %v1120
    %v1213 = vpop.f32.mrb[0].mxu0
    %v1214 = vadd.f32 %v1111, %v1213
    %v1215 = vpop.f32.mrb[0].mxu0
    %1216 = vmatprep.mubr.f32.mxu0 0.0
    %1217 = vmatmul.mubr.f32.gmra.mrb[0].mxu0 %v1123
    %v1218 = vpop.f32.mrb[0].mxu0
    %v1219 = vadd.f32 %v1111, %v1218
    %v1220 = vpop.f32.mrb[0].mxu0
    %1221 = vmatprep.mubr.f32.mxu0 0.0
    %1222 = vmatmul.mubr.f32.gmra.mrb[0].mxu0 %v1126
    %v1223 = vpop.f32.mrb[0].mxu0
    %v1224 = vadd.f32 %v1111, %v1223
    %v1225 = vpop.f32.mrb[0].mxu0
    %1226 = vmatprep.mubr.f32.mxu0 0.0
    %1227 = vmatmul.mubr.f32.gmra.mrb[0].mxu0 %v1129
    %v1228 = vpop.f32.mrb[0].mxu0
    %v1229 = vadd.f32 %v1111, %v1228
    %v1230 = vpop.f32.mrb[0].mxu0
    %1231 = vmatprep.mubr.f32.mxu0 0.0
    %1232 = vmatmul.mubr.f32.gmra.mrb[0].mxu0 %v1132
    %v1233 = vpop.f32.mrb[0].mxu0
    %v1234 = vadd.f32 %v1111, %v1233
    %v1235 = vpop.f32.mrb[0].mxu0
    %1236 = vmatprep.mubr.f32.mxu0 0.0
    %1237 = vmatmul.mubr.f32.gmra.mrb[0].mxu0 %v1135
    %v1238 = vpop.f32.mrb[0].mxu0
    %v1239 = vadd.f32 %v1111, %v1238
    %v1240 = vpop.f32.mrb[0].mxu0
    %1241 = vdwg.mxu0
    %1242 = vst [vmem:[#allocation2] sm:$0xff] %v1204
    %1243 = vst [vmem:[#allocation2 + $0x8] sm:$0xff] %v1209
    %1244 = vst [vmem:[#allocation2 + $0x10] sm:$0xff] %v1214
    %1245 = vst [vmem:[#allocation2 + $0x18] sm:$0xff] %v1219
    %1246 = vst [vmem:[#allocation2 + $0x20] sm:$0xff] %v1224
    %1247 = vst [vmem:[#allocation2 + $0x28] sm:$0xff] %v1229
    %1248 = vst [vmem:[#allocation2 + $0x30] sm:$0xff] %v1234
    %1249 = vst [vmem:[#allocation2 + $0x38] sm:$0xff] %v1239
    %s1250 = scalar_lea.vmem %s7, 8
    %v1251 = vld [vmem:[%s1250] sm:$0xff]
    %s1252 = scalar_lea.vmem [#allocation7], 8
    %v1253 = vld [vmem:[%s1252] sm:$0xff]
    %v1254 = vld [vmem:[#allocation2] sm:$0xff]
    %v1256 = vsel %vm93, %v1251, 0
    %1258 = vmatprep.subr.mxu0 0.0
    %1259 = vmatpush1.msra.mxu0 %v1094
    %1260 = vmatprep.subr.mxu0 0.0
    %1261 = vmatpush1.msra.mxu0 %v1095
    %1262 = vmatprep.subr.mxu0 0.0
    %1263 = vmatpush1.msra.mxu0 %v1096
    %1264 = vmatprep.subr.mxu0 0.0
    %1265 = vmatpush1.msra.mxu0 %v1097
    %1266 = vmatprep.subr.mxu0 0.0
    %1267 = vmatpush1.msra.mxu0 0.0
    %1268 = vmatprep.subr.mxu0 0.0
    %1269 = vmatpush1.msra.mxu0 0.0
    %1270 = vmatprep.subr.mxu0 0.0
    %1271 = vmatpush1.msra.mxu0 0.0
    %1272 = vmatprep.subr.mxu0 0.0
    %1273 = vmatpush1.msra.mxu0 0.0
    %1274 = vmatprep.subr.mxu0 0.0
    %1275 = vmatpush1.msra.mxu0 0.0
    %1276 = vmatprep.subr.mxu0 0.0
    %1277 = vmatpush1.msra.mxu0 0.0
    %1278 = vmatprep.subr.mxu0 0.0
    %1279 = vmatpush1.msra.mxu0 0.0
    %1280 = vmatprep.subr.mxu0 0.0
    %1281 = vmatpush1.msra.mxu0 0.0
    %1282 = vmatprep.subr.mxu0 0.0
    %1283 = vmatpush1.msra.mxu0 0.0
    %1284 = vmatprep.subr.mxu0 0.0
    %1285 = vmatpush1.msra.mxu0 0.0
    %1286 = vmatprep.subr.mxu0 0.0
    %1287 = vmatpush1.msra.mxu0 0.0
    %1288 = vmatprep.subr.mxu0 0.0
    %1289 = vmatpush1.msra.mxu0 0.0
    %1290 = vmatprep.subr.mxu0 0.0
    %1291 = vmatpush1.msra.mxu0 0.0
    %1292 = vmatprep.subr.mxu0 0.0
    %1293 = vmatpush1.msra.mxu0 0.0
    %1294 = vmatprep.subr.mxu0 0.0
    %1295 = vmatpush1.msra.mxu0 0.0
    %1296 = vmatprep.subr.mxu0 0.0
    %1297 = vmatpush1.msra.mxu0 0.0
    %1298 = vmatprep.subr.mxu0 0.0
    %1299 = vmatpush1.msra.mxu0 0.0
    %1300 = vmatprep.subr.mxu0 0.0
    %1301 = vmatpush1.msra.mxu0 0.0
    %1302 = vmatprep.subr.mxu0 0.0
    %1303 = vmatpush1.msra.mxu0 0.0
    %1304 = vmatprep.subr.mxu0 0.0
    %1305 = vmatpush1.msra.mxu0 0.0
    %1306 = vmatprep.subr.mxu0 0.0
    %1307 = vmatpush1.msra.mxu0 0.0
    %1308 = vmatprep.subr.mxu0 0.0
    %1309 = vmatpush1.msra.mxu0 0.0
    %1310 = vmatprep.subr.mxu0 0.0
    %1311 = vmatpush1.msra.mxu0 0.0
    %1312 = vmatprep.subr.mxu0 0.0
    %1313 = vmatpush1.msra.mxu0 0.0
    %1314 = vmatprep.subr.mxu0 0.0
    %1315 = vmatpush1.msra.mxu0 0.0
    %1316 = vmatprep.subr.mxu0 0.0
    %1317 = vmatpush1.msra.mxu0 0.0
    %1318 = vmatprep.subr.mxu0 0.0
    %1319 = vmatpush1.msra.mxu0 0.0
    %1320 = vmatprep.subr.mxu0 0.0
    %1321 = vmatpush1.msra.mxu0 0.0
    %1322 = vmatprep.mubr.f32.mxu0 0.0
    %1323 = vmatmul.mubr.f32.gmra.mrb[0].mxu0 %v1256
    %v1324 = vpop.f32.mrb[0].mxu0
    %v1325 = vadd.f32 0.0, %v1324
    %v1326 = vpop.f32.mrb[0].mxu0
    %1327 = vdwg.mxu0
    %v1328 = vadd.f32 %v1254, %v1325
    %v1329 = vtanh.pop %v1328
    %v1330 = vxor.u32 %v1328, 2147483648
    %v1331 = vmul.f32 %v1330, 1.442695
    %v1332 = vpow.pop %v1331
    %v1333 = vadd.f32 %v1332, 1.0
    %v1334 = vrcp.pop %v1333
    %v1335 = vmul.f32 1.0, %v1334
    %v1336 = vsel %vm69, %v1329, %v1335
    %1338 = vrot.lane.b32.xlu0 %v1253, 32
    %v1339 = vpop.permute.xlu0 %1338
    %v1341 = vmul.f32 %v1336, %v1339
    %1343 = vrot.lane.b32.xlu0 %v1336, 64
    %v1344 = vpop.permute.xlu0 %1343
    %v1346 = vmul.f32 %v1336, %v1344
    %1348 = vrot.lane.b32.xlu0 %v1346, 32
    %v1349 = vpop.permute.xlu0 %1348
    %v1351 = vadd.f32 %v1341, %v1349
    %v1352 = vtanh.pop %v1351
    %1354 = vrot.lane.b32.xlu0 %v1352, 64
    %v1355 = vpop.permute.xlu0 %1354
    %v1357 = vmul.f32 %v1336, %v1355
    %1359 = vrot.lane.b32.xlu0 %v1357, 32
    %v1360 = vpop.permute.xlu0 %1359
    %1362 = vst.msk [vmem:[#allocation3] sm:$0xff] %vm93, %v1360
    %v1363 = vld [vmem:[%s342] sm:$0xff]
    %v1364 = vsel %vm93, %v1360, 0
    %1366 = vmatprep.subr.mxu0 0.0
    %1367 = vmatpush1.msra.mxu0 %v1094
    %1368 = vmatprep.subr.mxu0 0.0
    %1369 = vmatpush1.msra.mxu0 %v1095
    %1370 = vmatprep.subr.mxu0 0.0
    %1371 = vmatpush1.msra.mxu0 %v1096
    %1372 = vmatprep.subr.mxu0 0.0
    %1373 = vmatpush1.msra.mxu0 %v1097
    %1374 = vmatprep.subr.mxu0 0.0
    %1375 = vmatpush1.msra.mxu0 0.0
    %1376 = vmatprep.subr.mxu0 0.0
    %1377 = vmatpush1.msra.mxu0 0.0
    %1378 = vmatprep.subr.mxu0 0.0
    %1379 = vmatpush1.msra.mxu0 0.0
    %1380 = vmatprep.subr.mxu0 0.0
    %1381 = vmatpush1.msra.mxu0 0.0
    %1382 = vmatprep.subr.mxu0 0.0
    %1383 = vmatpush1.msra.mxu0 0.0
    %1384 = vmatprep.subr.mxu0 0.0
    %1385 = vmatpush1.msra.mxu0 0.0
    %1386 = vmatprep.subr.mxu0 0.0
    %1387 = vmatpush1.msra.mxu0 0.0
    %1388 = vmatprep.subr.mxu0 0.0
    %1389 = vmatpush1.msra.mxu0 0.0
    %1390 = vmatprep.subr.mxu0 0.0
    %1391 = vmatpush1.msra.mxu0 0.0
    %1392 = vmatprep.subr.mxu0 0.0
    %1393 = vmatpush1.msra.mxu0 0.0
    %1394 = vmatprep.subr.mxu0 0.0
    %1395 = vmatpush1.msra.mxu0 0.0
    %1396 = vmatprep.subr.mxu0 0.0
    %1397 = vmatpush1.msra.mxu0 0.0
    %1398 = vmatprep.subr.mxu0 0.0
    %1399 = vmatpush1.msra.mxu0 0.0
    %1400 = vmatprep.subr.mxu0 0.0
    %1401 = vmatpush1.msra.mxu0 0.0
    %1402 = vmatprep.subr.mxu0 0.0
    %1403 = vmatpush1.msra.mxu0 0.0
    %1404 = vmatprep.subr.mxu0 0.0
    %1405 = vmatpush1.msra.mxu0 0.0
    %1406 = vmatprep.subr.mxu0 0.0
    %1407 = vmatpush1.msra.mxu0 0.0
    %1408 = vmatprep.subr.mxu0 0.0
    %1409 = vmatpush1.msra.mxu0 0.0
    %1410 = vmatprep.subr.mxu0 0.0
    %1411 = vmatpush1.msra.mxu0 0.0
    %1412 = vmatprep.subr.mxu0 0.0
    %1413 = vmatpush1.msra.mxu0 0.0
    %1414 = vmatprep.subr.mxu0 0.0
    %1415 = vmatpush1.msra.mxu0 0.0
    %1416 = vmatprep.subr.mxu0 0.0
    %1417 = vmatpush1.msra.mxu0 0.0
    %1418 = vmatprep.subr.mxu0 0.0
    %1419 = vmatpush1.msra.mxu0 0.0
    %1420 = vmatprep.subr.mxu0 0.0
    %1421 = vmatpush1.msra.mxu0 0.0
    %1422 = vmatprep.subr.mxu0 0.0
    %1423 = vmatpush1.msra.mxu0 0.0
    %1424 = vmatprep.subr.mxu0 0.0
    %1425 = vmatpush1.msra.mxu0 0.0
    %1426 = vmatprep.subr.mxu0 0.0
    %1427 = vmatpush1.msra.mxu0 0.0
    %1428 = vmatprep.subr.mxu0 0.0
    %1429 = vmatpush1.msra.mxu0 0.0
    %1430 = vmatprep.mubr.f32.mxu0 0.0
    %1431 = vmatmul.mubr.f32.gmra.mrb[0].mxu0 %v1364
    %v1432 = vpop.f32.mrb[0].mxu0
    %v1433 = vadd.f32 0.0, %v1432
    %v1434 = vpop.f32.mrb[0].mxu0
    %1435 = vdwg.mxu0
    %v1436 = vadd.f32 %v1363, %v1433
    %v1437 = vtanh.pop %v1436
    %v1438 = vxor.u32 %v1436, 2147483648
    %v1439 = vmul.f32 %v1438, 1.442695
    %v1440 = vpow.pop %v1439
    %v1441 = vadd.f32 %v1440, 1.0
    %v1442 = vrcp.pop %v1441
    %v1443 = vmul.f32 1.0, %v1442
    %v1444 = vsel %vm69, %v1437, %v1443
    %v1445 = vmul.f32 %v1444, %v1351
    %1447 = vrot.lane.b32.xlu0 %v1444, 64
    %v1448 = vpop.permute.xlu0 %1447
    %v1450 = vmul.f32 %v1444, %v1448
    %1452 = vrot.lane.b32.xlu0 %v1450, 32
    %v1453 = vpop.permute.xlu0 %1452
    %v1455 = vadd.f32 %v1445, %v1453
    %v1456 = vtanh.pop %v1455
    %1458 = vrot.lane.b32.xlu0 %v1456, 64
    %v1459 = vpop.permute.xlu0 %1458
    %v1461 = vmul.f32 %v1444, %v1459
    %1463 = vrot.lane.b32.xlu0 %v1461, 32
    %v1464 = vpop.permute.xlu0 %1463
    %1466 = vst.msk [vmem:[%s446] sm:$0xff] %vm93, %v1464
    %v1467 = vld [vmem:[%s448] sm:$0xff]
    %v1468 = vsel %vm93, %v1464, 0
    %1470 = vmatprep.subr.mxu0 0.0
    %1471 = vmatpush1.msra.mxu0 %v1094
    %1472 = vmatprep.subr.mxu0 0.0
    %1473 = vmatpush1.msra.mxu0 %v1095
    %1474 = vmatprep.subr.mxu0 0.0
    %1475 = vmatpush1.msra.mxu0 %v1096
    %1476 = vmatprep.subr.mxu0 0.0
    %1477 = vmatpush1.msra.mxu0 %v1097
    %1478 = vmatprep.subr.mxu0 0.0
    %1479 = vmatpush1.msra.mxu0 0.0
    %1480 = vmatprep.subr.mxu0 0.0
    %1481 = vmatpush1.msra.mxu0 0.0
    %1482 = vmatprep.subr.mxu0 0.0
    %1483 = vmatpush1.msra.mxu0 0.0
    %1484 = vmatprep.subr.mxu0 0.0
    %1485 = vmatpush1.msra.mxu0 0.0
    %1486 = vmatprep.subr.mxu0 0.0
    %1487 = vmatpush1.msra.mxu0 0.0
    %1488 = vmatprep.subr.mxu0 0.0
    %1489 = vmatpush1.msra.mxu0 0.0
    %1490 = vmatprep.subr.mxu0 0.0
    %1491 = vmatpush1.msra.mxu0 0.0
    %1492 = vmatprep.subr.mxu0 0.0
    %1493 = vmatpush1.msra.mxu0 0.0
    %1494 = vmatprep.subr.mxu0 0.0
    %1495 = vmatpush1.msra.mxu0 0.0
    %1496 = vmatprep.subr.mxu0 0.0
    %1497 = vmatpush1.msra.mxu0 0.0
    %1498 = vmatprep.subr.mxu0 0.0
    %1499 = vmatpush1.msra.mxu0 0.0
    %1500 = vmatprep.subr.mxu0 0.0
    %1501 = vmatpush1.msra.mxu0 0.0
    %1502 = vmatprep.subr.mxu0 0.0
    %1503 = vmatpush1.msra.mxu0 0.0
    %1504 = vmatprep.subr.mxu0 0.0
    %1505 = vmatpush1.msra.mxu0 0.0
    %1506 = vmatprep.subr.mxu0 0.0
    %1507 = vmatpush1.msra.mxu0 0.0
    %1508 = vmatprep.subr.mxu0 0.0
    %1509 = vmatpush1.msra.mxu0 0.0
    %1510 = vmatprep.subr.mxu0 0.0
    %1511 = vmatpush1.msra.mxu0 0.0
    %1512 = vmatprep.subr.mxu0 0.0
    %1513 = vmatpush1.msra.mxu0 0.0
    %1514 = vmatprep.subr.mxu0 0.0
    %1515 = vmatpush1.msra.mxu0 0.0
    %1516 = vmatprep.subr.mxu0 0.0
    %1517 = vmatpush1.msra.mxu0 0.0
    %1518 = vmatprep.subr.mxu0 0.0
    %1519 = vmatpush1.msra.mxu0 0.0
    %1520 = vmatprep.subr.mxu0 0.0
    %1521 = vmatpush1.msra.mxu0 0.0
    %1522 = vmatprep.subr.mxu0 0.0
    %1523 = vmatpush1.msra.mxu0 0.0
    %1524 = vmatprep.subr.mxu0 0.0
    %1525 = vmatpush1.msra.mxu0 0.0
    %1526 = vmatprep.subr.mxu0 0.0
    %1527 = vmatpush1.msra.mxu0 0.0
    %1528 = vmatprep.subr.mxu0 0.0
    %1529 = vmatpush1.msra.mxu0 0.0
    %1530 = vmatprep.subr.mxu0 0.0
    %1531 = vmatpush1.msra.mxu0 0.0
    %1532 = vmatprep.subr.mxu0 0.0
    %1533 = vmatpush1.msra.mxu0 0.0
    %1534 = vmatprep.mubr.f32.mxu0 0.0
    %1535 = vmatmul.mubr.f32.gmra.mrb[0].mxu0 %v1468
    %v1536 = vpop.f32.mrb[0].mxu0
    %v1537 = vadd.f32 0.0, %v1536
    %v1538 = vpop.f32.mrb[0].mxu0
    %1539 = vdwg.mxu0
    %v1540 = vadd.f32 %v1467, %v1537
    %v1541 = vtanh.pop %v1540
    %v1542 = vxor.u32 %v1540, 2147483648
    %v1543 = vmul.f32 %v1542, 1.442695
    %v1544 = vpow.pop %v1543
    %v1545 = vadd.f32 %v1544, 1.0
    %v1546 = vrcp.pop %v1545
    %v1547 = vmul.f32 1.0, %v1546
    %v1548 = vsel %vm69, %v1541, %v1547
    %v1549 = vmul.f32 %v1548, %v1455
    %1551 = vrot.lane.b32.xlu0 %v1548, 64
    %v1552 = vpop.permute.xlu0 %1551
    %v1554 = vmul.f32 %v1548, %v1552
    %1556 = vrot.lane.b32.xlu0 %v1554, 32
    %v1557 = vpop.permute.xlu0 %1556
    %v1559 = vadd.f32 %v1549, %v1557
    %v1560 = vtanh.pop %v1559
    %1562 = vrot.lane.b32.xlu0 %v1560, 64
    %v1563 = vpop.permute.xlu0 %1562
    %v1565 = vmul.f32 %v1548, %v1563
    %1567 = vrot.lane.b32.xlu0 %v1565, 32
    %v1568 = vpop.permute.xlu0 %1567
    %1570 = vst.msk [vmem:[%s552] sm:$0xff] %vm93, %v1568
    %v1571 = vld [vmem:[%s554] sm:$0xff]
    %v1572 = vsel %vm93, %v1568, 0
    %1574 = vmatprep.subr.mxu0 0.0
    %1575 = vmatpush1.msra.mxu0 %v1094
    %1576 = vmatprep.subr.mxu0 0.0
    %1577 = vmatpush1.msra.mxu0 %v1095
    %1578 = vmatprep.subr.mxu0 0.0
    %1579 = vmatpush1.msra.mxu0 %v1096
    %1580 = vmatprep.subr.mxu0 0.0
    %1581 = vmatpush1.msra.mxu0 %v1097
    %1582 = vmatprep.subr.mxu0 0.0
    %1583 = vmatpush1.msra.mxu0 0.0
    %1584 = vmatprep.subr.mxu0 0.0
    %1585 = vmatpush1.msra.mxu0 0.0
    %1586 = vmatprep.subr.mxu0 0.0
    %1587 = vmatpush1.msra.mxu0 0.0
    %1588 = vmatprep.subr.mxu0 0.0
    %1589 = vmatpush1.msra.mxu0 0.0
    %1590 = vmatprep.subr.mxu0 0.0
    %1591 = vmatpush1.msra.mxu0 0.0
    %1592 = vmatprep.subr.mxu0 0.0
    %1593 = vmatpush1.msra.mxu0 0.0
    %1594 = vmatprep.subr.mxu0 0.0
    %1595 = vmatpush1.msra.mxu0 0.0
    %1596 = vmatprep.subr.mxu0 0.0
    %1597 = vmatpush1.msra.mxu0 0.0
    %1598 = vmatprep.subr.mxu0 0.0
    %1599 = vmatpush1.msra.mxu0 0.0
    %1600 = vmatprep.subr.mxu0 0.0
    %1601 = vmatpush1.msra.mxu0 0.0
    %1602 = vmatprep.subr.mxu0 0.0
    %1603 = vmatpush1.msra.mxu0 0.0
    %1604 = vmatprep.subr.mxu0 0.0
    %1605 = vmatpush1.msra.mxu0 0.0
    %1606 = vmatprep.subr.mxu0 0.0
    %1607 = vmatpush1.msra.mxu0 0.0
    %1608 = vmatprep.subr.mxu0 0.0
    %1609 = vmatpush1.msra.mxu0 0.0
    %1610 = vmatprep.subr.mxu0 0.0
    %1611 = vmatpush1.msra.mxu0 0.0
    %1612 = vmatprep.subr.mxu0 0.0
    %1613 = vmatpush1.msra.mxu0 0.0
    %1614 = vmatprep.subr.mxu0 0.0
    %1615 = vmatpush1.msra.mxu0 0.0
    %1616 = vmatprep.subr.mxu0 0.0
    %1617 = vmatpush1.msra.mxu0 0.0
    %1618 = vmatprep.subr.mxu0 0.0
    %1619 = vmatpush1.msra.mxu0 0.0
    %1620 = vmatprep.subr.mxu0 0.0
    %1621 = vmatpush1.msra.mxu0 0.0
    %1622 = vmatprep.subr.mxu0 0.0
    %1623 = vmatpush1.msra.mxu0 0.0
    %1624 = vmatprep.subr.mxu0 0.0
    %1625 = vmatpush1.msra.mxu0 0.0
    %1626 = vmatprep.subr.mxu0 0.0
    %1627 = vmatpush1.msra.mxu0 0.0
    %1628 = vmatprep.subr.mxu0 0.0
    %1629 = vmatpush1.msra.mxu0 0.0
    %1630 = vmatprep.subr.mxu0 0.0
    %1631 = vmatpush1.msra.mxu0 0.0
    %1632 = vmatprep.subr.mxu0 0.0
    %1633 = vmatpush1.msra.mxu0 0.0
    %1634 = vmatprep.subr.mxu0 0.0
    %1635 = vmatpush1.msra.mxu0 0.0
    %1636 = vmatprep.subr.mxu0 0.0
    %1637 = vmatpush1.msra.mxu0 0.0
    %1638 = vmatprep.mubr.f32.mxu0 0.0
    %1639 = vmatmul.mubr.f32.gmra.mrb[0].mxu0 %v1572
    %v1640 = vpop.f32.mrb[0].mxu0
    %v1641 = vadd.f32 0.0, %v1640
    %v1642 = vpop.f32.mrb[0].mxu0
    %1643 = vdwg.mxu0
    %v1644 = vadd.f32 %v1571, %v1641
    %v1645 = vtanh.pop %v1644
    %v1646 = vxor.u32 %v1644, 2147483648
    %v1647 = vmul.f32 %v1646, 1.442695
    %v1648 = vpow.pop %v1647
    %v1649 = vadd.f32 %v1648, 1.0
    %v1650 = vrcp.pop %v1649
    %v1651 = vmul.f32 1.0, %v1650
    %v1652 = vsel %vm69, %v1645, %v1651
    %v1653 = vmul.f32 %v1652, %v1559
    %1655 = vrot.lane.b32.xlu0 %v1652, 64
    %v1656 = vpop.permute.xlu0 %1655
    %v1658 = vmul.f32 %v1652, %v1656
    %1660 = vrot.lane.b32.xlu0 %v1658, 32
    %v1661 = vpop.permute.xlu0 %1660
    %v1663 = vadd.f32 %v1653, %v1661
    %v1664 = vtanh.pop %v1663
    %1666 = vrot.lane.b32.xlu0 %v1664, 64
    %v1667 = vpop.permute.xlu0 %1666
    %v1669 = vmul.f32 %v1652, %v1667
    %1671 = vrot.lane.b32.xlu0 %v1669, 32
    %v1672 = vpop.permute.xlu0 %1671
    %1674 = vst.msk [vmem:[%s658] sm:$0xff] %vm93, %v1672
    %v1675 = vld [vmem:[%s660] sm:$0xff]
    %v1676 = vsel %vm93, %v1672, 0
    %1678 = vmatprep.subr.mxu0 0.0
    %1679 = vmatpush1.msra.mxu0 %v1094
    %1680 = vmatprep.subr.mxu0 0.0
    %1681 = vmatpush1.msra.mxu0 %v1095
    %1682 = vmatprep.subr.mxu0 0.0
    %1683 = vmatpush1.msra.mxu0 %v1096
    %1684 = vmatprep.subr.mxu0 0.0
    %1685 = vmatpush1.msra.mxu0 %v1097
    %1686 = vmatprep.subr.mxu0 0.0
    %1687 = vmatpush1.msra.mxu0 0.0
    %1688 = vmatprep.subr.mxu0 0.0
    %1689 = vmatpush1.msra.mxu0 0.0
    %1690 = vmatprep.subr.mxu0 0.0
    %1691 = vmatpush1.msra.mxu0 0.0
    %1692 = vmatprep.subr.mxu0 0.0
    %1693 = vmatpush1.msra.mxu0 0.0
    %1694 = vmatprep.subr.mxu0 0.0
    %1695 = vmatpush1.msra.mxu0 0.0
    %1696 = vmatprep.subr.mxu0 0.0
    %1697 = vmatpush1.msra.mxu0 0.0
    %1698 = vmatprep.subr.mxu0 0.0
    %1699 = vmatpush1.msra.mxu0 0.0
    %1700 = vmatprep.subr.mxu0 0.0
    %1701 = vmatpush1.msra.mxu0 0.0
    %1702 = vmatprep.subr.mxu0 0.0
    %1703 = vmatpush1.msra.mxu0 0.0
    %1704 = vmatprep.subr.mxu0 0.0
    %1705 = vmatpush1.msra.mxu0 0.0
    %1706 = vmatprep.subr.mxu0 0.0
    %1707 = vmatpush1.msra.mxu0 0.0
    %1708 = vmatprep.subr.mxu0 0.0
    %1709 = vmatpush1.msra.mxu0 0.0
    %1710 = vmatprep.subr.mxu0 0.0
    %1711 = vmatpush1.msra.mxu0 0.0
    %1712 = vmatprep.subr.mxu0 0.0
    %1713 = vmatpush1.msra.mxu0 0.0
    %1714 = vmatprep.subr.mxu0 0.0
    %1715 = vmatpush1.msra.mxu0 0.0
    %1716 = vmatprep.subr.mxu0 0.0
    %1717 = vmatpush1.msra.mxu0 0.0
    %1718 = vmatprep.subr.mxu0 0.0
    %1719 = vmatpush1.msra.mxu0 0.0
    %1720 = vmatprep.subr.mxu0 0.0
    %1721 = vmatpush1.msra.mxu0 0.0
    %1722 = vmatprep.subr.mxu0 0.0
    %1723 = vmatpush1.msra.mxu0 0.0
    %1724 = vmatprep.subr.mxu0 0.0
    %1725 = vmatpush1.msra.mxu0 0.0
    %1726 = vmatprep.subr.mxu0 0.0
    %1727 = vmatpush1.msra.mxu0 0.0
    %1728 = vmatprep.subr.mxu0 0.0
    %1729 = vmatpush1.msra.mxu0 0.0
    %1730 = vmatprep.subr.mxu0 0.0
    %1731 = vmatpush1.msra.mxu0 0.0
    %1732 = vmatprep.subr.mxu0 0.0
    %1733 = vmatpush1.msra.mxu0 0.0
    %1734 = vmatprep.subr.mxu0 0.0
    %1735 = vmatpush1.msra.mxu0 0.0
    %1736 = vmatprep.subr.mxu0 0.0
    %1737 = vmatpush1.msra.mxu0 0.0
    %1738 = vmatprep.subr.mxu0 0.0
    %1739 = vmatpush1.msra.mxu0 0.0
    %1740 = vmatprep.subr.mxu0 0.0
    %1741 = vmatpush1.msra.mxu0 0.0
    %1742 = vmatprep.mubr.f32.mxu0 0.0
    %1743 = vmatmul.mubr.f32.gmra.mrb[0].mxu0 %v1676
    %v1744 = vpop.f32.mrb[0].mxu0
    %v1745 = vadd.f32 0.0, %v1744
    %v1746 = vpop.f32.mrb[0].mxu0
    %1747 = vdwg.mxu0
    %v1748 = vadd.f32 %v1675, %v1745
    %v1749 = vtanh.pop %v1748
    %v1750 = vxor.u32 %v1748, 2147483648
    %v1751 = vmul.f32 %v1750, 1.442695
    %v1752 = vpow.pop %v1751
    %v1753 = vadd.f32 %v1752, 1.0
    %v1754 = vrcp.pop %v1753
    %v1755 = vmul.f32 1.0, %v1754
    %v1756 = vsel %vm69, %v1749, %v1755
    %v1757 = vmul.f32 %v1756, %v1663
    %1759 = vrot.lane.b32.xlu0 %v1756, 64
    %v1760 = vpop.permute.xlu0 %1759
    %v1762 = vmul.f32 %v1756, %v1760
    %1764 = vrot.lane.b32.xlu0 %v1762, 32
    %v1765 = vpop.permute.xlu0 %1764
    %v1767 = vadd.f32 %v1757, %v1765
    %v1768 = vtanh.pop %v1767
    %1770 = vrot.lane.b32.xlu0 %v1768, 64
    %v1771 = vpop.permute.xlu0 %1770
    %v1773 = vmul.f32 %v1756, %v1771
    %1775 = vrot.lane.b32.xlu0 %v1773, 32
    %v1776 = vpop.permute.xlu0 %1775
    %1778 = vst.msk [vmem:[%s764] sm:$0xff] %vm93, %v1776
    %v1779 = vld [vmem:[%s766] sm:$0xff]
    %v1780 = vsel %vm93, %v1776, 0
    %1782 = vmatprep.subr.mxu0 0.0
    %1783 = vmatpush1.msra.mxu0 %v1094
    %1784 = vmatprep.subr.mxu0 0.0
    %1785 = vmatpush1.msra.mxu0 %v1095
    %1786 = vmatprep.subr.mxu0 0.0
    %1787 = vmatpush1.msra.mxu0 %v1096
    %1788 = vmatprep.subr.mxu0 0.0
    %1789 = vmatpush1.msra.mxu0 %v1097
    %1790 = vmatprep.subr.mxu0 0.0
    %1791 = vmatpush1.msra.mxu0 0.0
    %1792 = vmatprep.subr.mxu0 0.0
    %1793 = vmatpush1.msra.mxu0 0.0
    %1794 = vmatprep.subr.mxu0 0.0
    %1795 = vmatpush1.msra.mxu0 0.0
    %1796 = vmatprep.subr.mxu0 0.0
    %1797 = vmatpush1.msra.mxu0 0.0
    %1798 = vmatprep.subr.mxu0 0.0
    %1799 = vmatpush1.msra.mxu0 0.0
    %1800 = vmatprep.subr.mxu0 0.0
    %1801 = vmatpush1.msra.mxu0 0.0
    %1802 = vmatprep.subr.mxu0 0.0
    %1803 = vmatpush1.msra.mxu0 0.0
    %1804 = vmatprep.subr.mxu0 0.0
    %1805 = vmatpush1.msra.mxu0 0.0
    %1806 = vmatprep.subr.mxu0 0.0
    %1807 = vmatpush1.msra.mxu0 0.0
    %1808 = vmatprep.subr.mxu0 0.0
    %1809 = vmatpush1.msra.mxu0 0.0
    %1810 = vmatprep.subr.mxu0 0.0
    %1811 = vmatpush1.msra.mxu0 0.0
    %1812 = vmatprep.subr.mxu0 0.0
    %1813 = vmatpush1.msra.mxu0 0.0
    %1814 = vmatprep.subr.mxu0 0.0
    %1815 = vmatpush1.msra.mxu0 0.0
    %1816 = vmatprep.subr.mxu0 0.0
    %1817 = vmatpush1.msra.mxu0 0.0
    %1818 = vmatprep.subr.mxu0 0.0
    %1819 = vmatpush1.msra.mxu0 0.0
    %1820 = vmatprep.subr.mxu0 0.0
    %1821 = vmatpush1.msra.mxu0 0.0
    %1822 = vmatprep.subr.mxu0 0.0
    %1823 = vmatpush1.msra.mxu0 0.0
    %1824 = vmatprep.subr.mxu0 0.0
    %1825 = vmatpush1.msra.mxu0 0.0
    %1826 = vmatprep.subr.mxu0 0.0
    %1827 = vmatpush1.msra.mxu0 0.0
    %1828 = vmatprep.subr.mxu0 0.0
    %1829 = vmatpush1.msra.mxu0 0.0
    %1830 = vmatprep.subr.mxu0 0.0
    %1831 = vmatpush1.msra.mxu0 0.0
    %1832 = vmatprep.subr.mxu0 0.0
    %1833 = vmatpush1.msra.mxu0 0.0
    %1834 = vmatprep.subr.mxu0 0.0
    %1835 = vmatpush1.msra.mxu0 0.0
    %1836 = vmatprep.subr.mxu0 0.0
    %1837 = vmatpush1.msra.mxu0 0.0
    %1838 = vmatprep.subr.mxu0 0.0
    %1839 = vmatpush1.msra.mxu0 0.0
    %1840 = vmatprep.subr.mxu0 0.0
    %1841 = vmatpush1.msra.mxu0 0.0
    %1842 = vmatprep.subr.mxu0 0.0
    %1843 = vmatpush1.msra.mxu0 0.0
    %1844 = vmatprep.subr.mxu0 0.0
    %1845 = vmatpush1.msra.mxu0 0.0
    %1846 = vmatprep.mubr.f32.mxu0 0.0
    %1847 = vmatmul.mubr.f32.gmra.mrb[0].mxu0 %v1780
    %v1848 = vpop.f32.mrb[0].mxu0
    %v1849 = vadd.f32 0.0, %v1848
    %v1850 = vpop.f32.mrb[0].mxu0
    %1851 = vdwg.mxu0
    %v1852 = vadd.f32 %v1779, %v1849
    %v1853 = vtanh.pop %v1852
    %v1854 = vxor.u32 %v1852, 2147483648
    %v1855 = vmul.f32 %v1854, 1.442695
    %v1856 = vpow.pop %v1855
    %v1857 = vadd.f32 %v1856, 1.0
    %v1858 = vrcp.pop %v1857
    %v1859 = vmul.f32 1.0, %v1858
    %v1860 = vsel %vm69, %v1853, %v1859
    %v1861 = vmul.f32 %v1860, %v1767
    %1863 = vrot.lane.b32.xlu0 %v1860, 64
    %v1864 = vpop.permute.xlu0 %1863
    %v1866 = vmul.f32 %v1860, %v1864
    %1868 = vrot.lane.b32.xlu0 %v1866, 32
    %v1869 = vpop.permute.xlu0 %1868
    %v1871 = vadd.f32 %v1861, %v1869
    %v1872 = vtanh.pop %v1871
    %1874 = vrot.lane.b32.xlu0 %v1872, 64
    %v1875 = vpop.permute.xlu0 %1874
    %v1877 = vmul.f32 %v1860, %v1875
    %1879 = vrot.lane.b32.xlu0 %v1877, 32
    %v1880 = vpop.permute.xlu0 %1879
    %1882 = vst.msk [vmem:[%s870] sm:$0xff] %vm93, %v1880
    %v1883 = vld [vmem:[%s872] sm:$0xff]
    %v1884 = vsel %vm93, %v1880, 0
    %1886 = vmatprep.subr.mxu0 0.0
    %1887 = vmatpush1.msra.mxu0 %v1094
    %1888 = vmatprep.subr.mxu0 0.0
    %1889 = vmatpush1.msra.mxu0 %v1095
    %1890 = vmatprep.subr.mxu0 0.0
    %1891 = vmatpush1.msra.mxu0 %v1096
    %1892 = vmatprep.subr.mxu0 0.0
    %1893 = vmatpush1.msra.mxu0 %v1097
    %1894 = vmatprep.subr.mxu0 0.0
    %1895 = vmatpush1.msra.mxu0 0.0
    %1896 = vmatprep.subr.mxu0 0.0
    %1897 = vmatpush1.msra.mxu0 0.0
    %1898 = vmatprep.subr.mxu0 0.0
    %1899 = vmatpush1.msra.mxu0 0.0
    %1900 = vmatprep.subr.mxu0 0.0
    %1901 = vmatpush1.msra.mxu0 0.0
    %1902 = vmatprep.subr.mxu0 0.0
    %1903 = vmatpush1.msra.mxu0 0.0
    %1904 = vmatprep.subr.mxu0 0.0
    %1905 = vmatpush1.msra.mxu0 0.0
    %1906 = vmatprep.subr.mxu0 0.0
    %1907 = vmatpush1.msra.mxu0 0.0
    %1908 = vmatprep.subr.mxu0 0.0
    %1909 = vmatpush1.msra.mxu0 0.0
    %1910 = vmatprep.subr.mxu0 0.0
    %1911 = vmatpush1.msra.mxu0 0.0
    %1912 = vmatprep.subr.mxu0 0.0
    %1913 = vmatpush1.msra.mxu0 0.0
    %1914 = vmatprep.subr.mxu0 0.0
    %1915 = vmatpush1.msra.mxu0 0.0
    %1916 = vmatprep.subr.mxu0 0.0
    %1917 = vmatpush1.msra.mxu0 0.0
    %1918 = vmatprep.subr.mxu0 0.0
    %1919 = vmatpush1.msra.mxu0 0.0
    %1920 = vmatprep.subr.mxu0 0.0
    %1921 = vmatpush1.msra.mxu0 0.0
    %1922 = vmatprep.subr.mxu0 0.0
    %1923 = vmatpush1.msra.mxu0 0.0
    %1924 = vmatprep.subr.mxu0 0.0
    %1925 = vmatpush1.msra.mxu0 0.0
    %1926 = vmatprep.subr.mxu0 0.0
    %1927 = vmatpush1.msra.mxu0 0.0
    %1928 = vmatprep.subr.mxu0 0.0
    %1929 = vmatpush1.msra.mxu0 0.0
    %1930 = vmatprep.subr.mxu0 0.0
    %1931 = vmatpush1.msra.mxu0 0.0
    %1932 = vmatprep.subr.mxu0 0.0
    %1933 = vmatpush1.msra.mxu0 0.0
    %1934 = vmatprep.subr.mxu0 0.0
    %1935 = vmatpush1.msra.mxu0 0.0
    %1936 = vmatprep.subr.mxu0 0.0
    %1937 = vmatpush1.msra.mxu0 0.0
    %1938 = vmatprep.subr.mxu0 0.0
    %1939 = vmatpush1.msra.mxu0 0.0
    %1940 = vmatprep.subr.mxu0 0.0
    %1941 = vmatpush1.msra.mxu0 0.0
    %1942 = vmatprep.subr.mxu0 0.0
    %1943 = vmatpush1.msra.mxu0 0.0
    %1944 = vmatprep.subr.mxu0 0.0
    %1945 = vmatpush1.msra.mxu0 0.0
    %1946 = vmatprep.subr.mxu0 0.0
    %1947 = vmatpush1.msra.mxu0 0.0
    %1948 = vmatprep.subr.mxu0 0.0
    %1949 = vmatpush1.msra.mxu0 0.0
    %1950 = vmatprep.mubr.f32.mxu0 0.0
    %1951 = vmatmul.mubr.f32.gmra.mrb[0].mxu0 %v1884
    %v1952 = vpop.f32.mrb[0].mxu0
    %v1953 = vadd.f32 0.0, %v1952
    %v1954 = vpop.f32.mrb[0].mxu0
    %1955 = vdwg.mxu0
    %v1956 = vadd.f32 %v1883, %v1953
    %v1957 = vtanh.pop %v1956
    %v1958 = vxor.u32 %v1956, 2147483648
    %v1959 = vmul.f32 %v1958, 1.442695
    %v1960 = vpow.pop %v1959
    %v1961 = vadd.f32 %v1960, 1.0
    %v1962 = vrcp.pop %v1961
    %v1963 = vmul.f32 1.0, %v1962
    %v1964 = vsel %vm69, %v1957, %v1963
    %v1965 = vmul.f32 %v1964, %v1871
    %1967 = vrot.lane.b32.xlu0 %v1964, 64
    %v1968 = vpop.permute.xlu0 %1967
    %v1970 = vmul.f32 %v1964, %v1968
    %1972 = vrot.lane.b32.xlu0 %v1970, 32
    %v1973 = vpop.permute.xlu0 %1972
    %v1975 = vadd.f32 %v1965, %v1973
    %v1976 = vtanh.pop %v1975
    %1978 = vrot.lane.b32.xlu0 %v1976, 64
    %v1979 = vpop.permute.xlu0 %1978
    %v1981 = vmul.f32 %v1964, %v1979
    %1983 = vrot.lane.b32.xlu0 %v1981, 32
    %v1984 = vpop.permute.xlu0 %1983
    %1986 = vst.msk [vmem:[%s976] sm:$0xff] %vm93, %v1984
    %v1987 = vld [vmem:[%s978] sm:$0xff]
    %v1988 = vsel %vm93, %v1984, 0
    %1990 = vmatprep.subr.mxu0 0.0
    %1991 = vmatpush1.msra.mxu0 %v1094
    %1992 = vmatprep.subr.mxu0 0.0
    %1993 = vmatpush1.msra.mxu0 %v1095
    %1994 = vmatprep.subr.mxu0 0.0
    %1995 = vmatpush1.msra.mxu0 %v1096
    %1996 = vmatprep.subr.mxu0 0.0
    %1997 = vmatpush1.msra.mxu0 %v1097
    %1998 = vmatprep.subr.mxu0 0.0
    %1999 = vmatpush1.msra.mxu0 0.0
    %2000 = vmatprep.subr.mxu0 0.0
    %2001 = vmatpush1.msra.mxu0 0.0
    %2002 = vmatprep.subr.mxu0 0.0
    %2003 = vmatpush1.msra.mxu0 0.0
    %2004 = vmatprep.subr.mxu0 0.0
    %2005 = vmatpush1.msra.mxu0 0.0
    %2006 = vmatprep.subr.mxu0 0.0
    %2007 = vmatpush1.msra.mxu0 0.0
    %2008 = vmatprep.subr.mxu0 0.0
    %2009 = vmatpush1.msra.mxu0 0.0
    %2010 = vmatprep.subr.mxu0 0.0
    %2011 = vmatpush1.msra.mxu0 0.0
    %2012 = vmatprep.subr.mxu0 0.0
    %2013 = vmatpush1.msra.mxu0 0.0
    %2014 = vmatprep.subr.mxu0 0.0
    %2015 = vmatpush1.msra.mxu0 0.0
    %2016 = vmatprep.subr.mxu0 0.0
    %2017 = vmatpush1.msra.mxu0 0.0
    %2018 = vmatprep.subr.mxu0 0.0
    %2019 = vmatpush1.msra.mxu0 0.0
    %2020 = vmatprep.subr.mxu0 0.0
    %2021 = vmatpush1.msra.mxu0 0.0
    %2022 = vmatprep.subr.mxu0 0.0
    %2023 = vmatpush1.msra.mxu0 0.0
    %2024 = vmatprep.subr.mxu0 0.0
    %2025 = vmatpush1.msra.mxu0 0.0
    %2026 = vmatprep.subr.mxu0 0.0
    %2027 = vmatpush1.msra.mxu0 0.0
    %2028 = vmatprep.subr.mxu0 0.0
    %2029 = vmatpush1.msra.mxu0 0.0
    %2030 = vmatprep.subr.mxu0 0.0
    %2031 = vmatpush1.msra.mxu0 0.0
    %2032 = vmatprep.subr.mxu0 0.0
    %2033 = vmatpush1.msra.mxu0 0.0
    %2034 = vmatprep.subr.mxu0 0.0
    %2035 = vmatpush1.msra.mxu0 0.0
    %2036 = vmatprep.subr.mxu0 0.0
    %2037 = vmatpush1.msra.mxu0 0.0
    %2038 = vmatprep.subr.mxu0 0.0
    %2039 = vmatpush1.msra.mxu0 0.0
    %2040 = vmatprep.subr.mxu0 0.0
    %2041 = vmatpush1.msra.mxu0 0.0
    %2042 = vmatprep.subr.mxu0 0.0
    %2043 = vmatpush1.msra.mxu0 0.0
    %2044 = vmatprep.subr.mxu0 0.0
    %2045 = vmatpush1.msra.mxu0 0.0
    %2046 = vmatprep.subr.mxu0 0.0
    %2047 = vmatpush1.msra.mxu0 0.0
    %2048 = vmatprep.subr.mxu0 0.0
    %2049 = vmatpush1.msra.mxu0 0.0
    %2050 = vmatprep.subr.mxu0 0.0
    %2051 = vmatpush1.msra.mxu0 0.0
    %2052 = vmatprep.subr.mxu0 0.0
    %2053 = vmatpush1.msra.mxu0 0.0
    %2054 = vmatprep.mubr.f32.mxu0 0.0
    %2055 = vmatmul.mubr.f32.gmra.mrb[0].mxu0 %v1988
    %v2056 = vpop.f32.mrb[0].mxu0
    %v2057 = vadd.f32 0.0, %v2056
    %v2058 = vpop.f32.mrb[0].mxu0
    %2059 = vdwg.mxu0
    %v2060 = vadd.f32 %v1987, %v2057
    %v2061 = vtanh.pop %v2060
    %v2062 = vxor.u32 %v2060, 2147483648
    %v2063 = vmul.f32 %v2062, 1.442695
    %v2064 = vpow.pop %v2063
    %v2065 = vadd.f32 %v2064, 1.0
    %v2066 = vrcp.pop %v2065
    %v2067 = vmul.f32 1.0, %v2066
    %v2068 = vsel %vm69, %v2061, %v2067
    %v2069 = vmul.f32 %v2068, %v1975
    %2071 = vrot.lane.b32.xlu0 %v2068, 64
    %v2072 = vpop.permute.xlu0 %2071
    %v2074 = vmul.f32 %v2068, %v2072
    %2076 = vrot.lane.b32.xlu0 %v2074, 32
    %v2077 = vpop.permute.xlu0 %2076
    %v2079 = vadd.f32 %v2069, %v2077
    %v2080 = vtanh.pop %v2079
    %2082 = vrot.lane.b32.xlu0 %v2080, 64
    %v2083 = vpop.permute.xlu0 %2082
    %v2085 = vmul.f32 %v2068, %v2083
    %2087 = vrot.lane.b32.xlu0 %v2085, 32
    %v2088 = vpop.permute.xlu0 %2087
    %2090 = vst.msk [vmem:[%s1082] sm:$0xff] %vm93, %v2088
    %s2091 = scalar_lea.vmem [#allocation9], 8
    %2092 = vst.msk [vmem:[%s2091] sm:$0xff] %vm93, %v2088
    %2094 = vrot.lane.b32.xlu0 %v2079, 96
    %v2095 = vpop.permute.xlu0 %2094
    %s2097 = scalar_lea.vmem [#allocation10], 8
    %2098 = vst.msk [vmem:[%s2097] sm:$0xff] %vm93, %v2095
    %v2099 = vld [vmem:[#allocation3] sm:$0xff]
    %v2100 = vld [vmem:[#allocation3 + $0x8] sm:$0xff]
    %v2101 = vld [vmem:[#allocation3 + $0x10] sm:$0xff]
    %v2102 = vld [vmem:[#allocation3 + $0x18] sm:$0xff]
    %v2103 = vld [vmem:[#allocation3 + $0x20] sm:$0xff]
    %v2104 = vld [vmem:[#allocation3 + $0x28] sm:$0xff]
    %v2105 = vld [vmem:[#allocation3 + $0x30] sm:$0xff]
    %v2106 = vld [vmem:[#allocation3 + $0x38] sm:$0xff]
    %2107 = vst.msk [vmem:[%s9] sm:$0xff] %vm93, %v2099
    %2108 = vst.msk [vmem:[%s9 + $0x8] sm:$0xff] %vm93, %v2100
    %2109 = vst.msk [vmem:[%s9 + $0x10] sm:$0xff] %vm93, %v2101
    %2110 = vst.msk [vmem:[%s9 + $0x18] sm:$0xff] %vm93, %v2102
    %2111 = vst.msk [vmem:[%s9 + $0x20] sm:$0xff] %vm93, %v2103
    %2112 = vst.msk [vmem:[%s9 + $0x28] sm:$0xff] %vm93, %v2104
    %2113 = vst.msk [vmem:[%s9 + $0x30] sm:$0xff] %vm93, %v2105
    %2114 = vst.msk [vmem:[%s9 + $0x38] sm:$0xff] %vm93, %v2106
    // Predicated region
    $region46: #{tpu_custom_call.1} parent=1 // pred_check
      _
    $region47: #{tpu_custom_call.1} parent=1 // pred_check_branch
      %2116 = sbr.rel (0) target = $region49
    $region48: #{tpu_custom_call.1} parent=1 // pred_region
      _
    $region49: #{tpu_custom_call.1} parent=1 // pred_fallthru
      _
    // Predicated region
    $region50: #{tpu_custom_call.1} parent=1 // pred_check
      _
    $region51: #{tpu_custom_call.1} parent=1 // pred_check_branch
      %2118 = sbr.rel (0) target = $region53
    $region52: #{tpu_custom_call.1} parent=1 // pred_region
      %s2120 = ssub.s32 256, 256
      %2121 = vsyncadd [#allocation6], %s2120
      %s2122 = sshll.u32 [#allocation9], 4
      %s2123 = int_to_ptr.vmem [resolvable:$true] %s2122
      %2128 = dma.vmem_to_hbm [thread:$0]  %s2123, 256, %s10, [#allocation6], 128, 128, 8
    $region53: #{tpu_custom_call.1} parent=1 // pred_fallthru
      _
    // Predicated region
    $region54: #{tpu_custom_call.1} parent=1 // pred_check
      _
    $region55: #{tpu_custom_call.1} parent=1 // pred_check_branch
      %2130 = sbr.rel (0) target = $region57
    $region56: #{tpu_custom_call.1} parent=1 // pred_region
      %s2132 = ssub.s32 256, 256
      %2133 = vsyncadd [#allocation11], %s2132
      %s2134 = sshll.u32 [#allocation10], 4
      %s2135 = int_to_ptr.vmem [resolvable:$true] %s2134
      %2140 = dma.vmem_to_hbm [thread:$0]  %s2135, 256, %s11, [#allocation11], 128, 128, 8
    $region57: #{tpu_custom_call.1} parent=1 // pred_fallthru
      _
    // Predicated region
    $region58: #{tpu_custom_call.1} parent=1 // pred_check
      _
    $region59: #{tpu_custom_call.1} parent=1 // pred_check_branch
      %2142 = sbr.rel (0) target = $region61
    $region60: #{tpu_custom_call.1} parent=1 // pred_region
      _
    $region61: #{tpu_custom_call.1} parent=1 // pred_fallthru
      _
    // Predicated region
    $region62: #{tpu_custom_call.1} parent=1 // pred_check
      _
    $region63: #{tpu_custom_call.1} parent=1 // pred_check_branch
      %2144 = sbr.rel (0) target = $region65
    $region64: #{tpu_custom_call.1} parent=1 // pred_region
      %2145 = dma.done [#allocation6], 256
    $region65: #{tpu_custom_call.1} parent=1 // pred_fallthru
      _
    // Predicated region
    $region66: #{tpu_custom_call.1} parent=1 // pred_check
      _
    $region67: #{tpu_custom_call.1} parent=1 // pred_check_branch
      %2147 = sbr.rel (0) target = $region69
    $region68: #{tpu_custom_call.1} parent=1 // pred_region
      %2148 = dma.done [#allocation11], 256
    $region69: #{tpu_custom_call.1} parent=1 // pred_fallthru
      _
    %2149 = vsyncpa [#allocation5], 1
    %2150 = vsyncpa [#allocation8], 1
    %2151 = vsyncpa [#allocation6], 1
    %2152 = vsyncpa [#allocation11], 1

</llo_original>
